<compile_context>
chip_gen: v7x
topology: tpu7x:2x2x1
jax: 0.10.0
libtpu: 0.0.40
codegen_flags: <defaults>
</compile_context>

<pallas_src>
import math
import functools

import jax
import jax.numpy as jnp
from jax.experimental import pallas as pl
from jax.experimental.pallas import tpu as pltpu


# ----------------------------------------------------------------------------
# Pallas kernel: one (batch-tile, q-tile) step of multi-head attention.
# ----------------------------------------------------------------------------
def _mha_kernel(q_ref, k_ref, v_ref, mask_ref,
                wq_ref, bq_ref, wk_ref, bk_ref, wv_ref, bv_ref, wo_ref, bo_ref,
                y_ref, attn_ref,
                kp_ref, vp_ref, ctx_ref,
                *, num_heads: int, head_dim: int):
    f32 = jnp.float32
    bf16 = jnp.bfloat16
    Bt, Tq, D = q_ref.shape
    _, Sk, _ = k_ref.shape
    H, dh = num_heads, head_dim

    # fused projection + ReLU: one (rows, D) @ (D, D) MXU matmul (bf16, f32 acc)
    def proj_relu(x3, w_ref, b_ref):
        rows = x3.shape[0] * x3.shape[1]
        z = jnp.dot(x3.reshape(rows, D), w_ref[...],
                    preferred_element_type=f32) + b_ref[...]
        return jnp.maximum(z, 0.0)                      # activation = relu

    # --- K/V projections are shared by every q-tile of this batch tile:
    #     compute once (first q-tile) into resident bf16 VMEM scratch.
    @pl.when(pl.program_id(1) == 0)
    def _():
        kp_ref[...] = proj_relu(k_ref[...], wk_ref, bk_ref).astype(bf16)
        vp_ref[...] = proj_relu(v_ref[...], wv_ref, bv_ref).astype(bf16)

    # --- Q projection for this q tile; fold 1/sqrt(dh) into q (Nq*dh muls).
    scale = 1.0 / math.sqrt(dh)
    qb = (proj_relu(q_ref[...], wq_ref, bq_ref) * scale).astype(bf16)
    qb = qb.reshape(Bt, Tq, D)
    kb = kp_ref[...].reshape(Bt, Sk, D)
    vb = vp_ref[...].reshape(Bt, Sk, D)

    # --- Mask bias computed ONCE (int8 0/1 mask -> additive bias), shared by
    #     all heads; no float equality compare, no head-repeat materialized.
    mbias = (mask_ref[...].astype(f32) - 1.0) * 1e10    # 0 keep / -1e10 masked

    # --- Per-head QK^T (MXU), results stacked along a major axis (free concat)
    #     so masking + softmax + store happen once for the whole block.
    scores = jnp.stack(
        [jnp.einsum('bqd,bkd->bqk',
                    qb[..., h * dh:(h + 1) * dh],
                    kb[..., h * dh:(h + 1) * dh],
                    preferred_element_type=f32)
         for h in range(H)],
        axis=1)                                         # (Bt, H, Tq, Sk) f32
    scores = scores + mbias[:, None, :, :]

    # --- ONE softmax over the whole (Bt, H, Tq, Sk) block, f32, exact
    #     normalization (probabilities are returned to the user).
    scores = scores - jnp.max(scores, axis=-1, keepdims=True)
    p = jnp.exp(scores)
    inv = 1.0 / jnp.sum(p, axis=-1, keepdims=True)
    attn = p * inv
    attn_ref[...] = attn.astype(attn_ref.dtype)         # single full-block store

    # --- attention @ V per head; merged-head context assembled in bf16 VMEM
    #     scratch so the output projection stays ONE big (Bt*Tq, D) @ (D, D)
    #     MXU call (full-K utilization).
    attn_b = attn.astype(bf16)
    for h in range(H):
        c = jnp.einsum('bqk,bkd->bqd',
                       attn_b[:, h], vb[..., h * dh:(h + 1) * dh],
                       preferred_element_type=f32)       # (Bt, Tq, dh)
        ctx_ref[:, h * dh:(h + 1) * dh] = c.reshape(Bt * Tq, dh).astype(bf16)

    # --- Output projection + ReLU on merged heads.
    y = jnp.dot(ctx_ref[...], wo_ref[...],
                preferred_element_type=f32) + bo_ref[...]
    y_ref[...] = jnp.maximum(y, 0.0).reshape(Bt, Tq, D).astype(y_ref.dtype)


# ----------------------------------------------------------------------------
# Wrapper
# ----------------------------------------------------------------------------
def multi_head_attention(q, k, v, mask, params, num_heads, *,
                         block_b=8, block_q=256, attn_dtype=jnp.float32):
    """q: (B, Sq, D), k/v: (B, Sk, D), mask: (B, Sq, Sk) / (1, Sq, Sk) / None.
    Returns (y (B, Sq, D), attn (B*num_heads, Sq, Sk)) like the PyTorch module."""
    B, Sq, D = q.shape
    _, Sk, _ = k.shape
    assert D % num_heads == 0
    dh = D // num_heads
    H = num_heads

    # ---- mask: int8 0/1; a (1, Sq, Sk) mask is batch-invariant and kept resident
    if mask is None:
        mask = jnp.ones((1, Sq, Sk), jnp.float32)
    if mask.ndim == 2:
        mask = mask[None]
    mask_invariant = (mask.shape[0] == 1)
    if not mask_invariant:
        assert mask.shape[0] == B, "mask batch dim must be 1 or B"
    mask_i8 = (mask != 0).astype(jnp.int8)
    mb = 1 if mask_invariant else None  # filled below with bt

    # ---- batch tile: largest divisor of B <= block_b, capped so the "parallel"
    #      batch axis has >= 2 steps when B > 1 (both v7x TensorCores get work).
    bt = max(1, min(block_b, B if B < 2 else B // 2))
    while B % bt:
        bt -= 1
    mb = 1 if mask_invariant else bt

    # ---- q tile: full Sq if small, else a divisor of Sq that is a multiple of 8
    if Sq <= block_q:
        tq = Sq
    else:
        tq = None
        for t in range(min(block_q, Sq), 7, -1):
            if Sq % t == 0 and t % 8 == 0:
                tq = t
                break
        if tq is None:
            tq = Sq

    wq, bq, wk, bk, wv, bv, wo, bo = params
    bf16 = jnp.bfloat16
    args = (q.astype(bf16), k.astype(bf16), v.astype(bf16), mask_i8,
            wq.astype(bf16), bq, wk.astype(bf16), bk,
            wv.astype(bf16), bv, wo.astype(bf16), bo)

    # ---- VMEM budget -> explicit vmem_limit_bytes (v5e default is only 16 MiB,
    #      v6e/v7x 32 MiB); clamp to physical capacity of the current chip.
    attn_bytes = jnp.dtype(attn_dtype).itemsize
    est = 0
    est += 2 * bt * tq * D * 2                       # q blocks (double-buffered, bf16)
    est += 2 * 2 * bt * Sk * D * 2                   # k, v blocks
    est += 2 * mb * tq * Sk * 1                      # int8 mask blocks
    est += 2 * 4 * (D * D * 2 + D * 4)               # weights (bf16) + biases (f32)
    est += 2 * bt * tq * D * 4                       # y blocks (f32)
    est += 2 * bt * H * tq * Sk * attn_bytes         # attention blocks
    est += (2 * bt * Sk * D + bt * tq * D) * 2       # kp/vp/ctx bf16 scratch
    est += 4 * bt * H * tq * Sk * 4                  # score/prob f32 temporaries
    est += 6 * bt * max(tq, Sk) * D * 4              # projection f32 temporaries
    try:
        phys = getattr(pltpu.get_tpu_info(), "vmem_capacity_bytes",
                       64 * 1024 * 1024)
    except Exception:
        phys = 64 * 1024 * 1024                      # conservative (v7x) fallback
    vmem_limit = int(max(32 * 1024 * 1024,
                         min(2 * est, phys - 8 * 1024 * 1024)))

    kernel = functools.partial(_mha_kernel, num_heads=H, head_dim=dh)
    rep = lambda i, j: (0, 0)       # weights/biases resident for every grid step
    mask_map = (lambda i, j: (0, j, 0)) if mask_invariant else (lambda i, j: (i, j, 0))

    grid_spec = pltpu.PrefetchScalarGridSpec(
        num_scalar_prefetch=0,
        grid=(B // bt, Sq // tq),
        in_specs=[
            pl.BlockSpec((bt, tq, D), lambda i, j: (i, j, 0)),   # q
            pl.BlockSpec((bt, Sk, D), lambda i, j: (i, 0, 0)),   # k
            pl.BlockSpec((bt, Sk, D), lambda i, j: (i, 0, 0)),   # v
            pl.BlockSpec((mb, tq, Sk), mask_map),                # mask (int8)
            pl.BlockSpec(wq.shape, rep), pl.BlockSpec(bq.shape, rep),
            pl.BlockSpec(wk.shape, rep), pl.BlockSpec(bk.shape, rep),
            pl.BlockSpec(wv.shape, rep), pl.BlockSpec(bv.shape, rep),
            pl.BlockSpec(wo.shape, rep), pl.BlockSpec(bo.shape, rep),
        ],
        out_specs=[
            pl.BlockSpec((bt, tq, D), lambda i, j: (i, j, 0)),          # y
            pl.BlockSpec((bt, H, tq, Sk), lambda i, j: (i, 0, j, 0)),   # attention
        ],
        scratch_shapes=[
            pltpu.VMEM((bt * Sk, D), jnp.bfloat16),   # K projection (resident per batch tile)
            pltpu.VMEM((bt * Sk, D), jnp.bfloat16),   # V projection
            pltpu.VMEM((bt * tq, D), jnp.bfloat16),   # merged-head context
        ],
    )

    y, attn_bhqk = pl.pallas_call(
        kernel,
        out_shape=(jax.ShapeDtypeStruct((B, Sq, D), jnp.float32),
                   jax.ShapeDtypeStruct((B, H, Sq, Sk), attn_dtype)),
        grid_spec=grid_spec,
        compiler_params=pltpu.CompilerParams(
            dimension_semantics=("parallel", "arbitrary"),
            vmem_limit_bytes=vmem_limit),
    )(*args)

    # (B, H, Sq, Sk) -> (B*H, Sq, Sk): contiguous view, no data movement.
    attn = attn_bhqk.reshape(B * H, Sq, Sk)
    return y, attn


# ----------------------------------------------------------------------------
# Deterministic parameter init (PyTorch nn.Linear-style uniform bounds).
# ----------------------------------------------------------------------------
def _init_linear(key, din, dout):
    kw, kb = jax.random.split(key)
    bound = 1.0 / math.sqrt(din)
    w = jax.random.uniform(kw, (din, dout), jnp.float32, -bound, bound)
    b = jax.random.uniform(kb, (1, dout), jnp.float32, -bound, bound)
    return w, b


def init_mha_params(key, d):
    ks = jax.random.split(key, 4)
    wq, bq = _init_linear(ks[0], d, d)
    wk, bk = _init_linear(ks[1], d, d)
    wv, bv = _init_linear(ks[2], d, d)
    wo, bo = _init_linear(ks[3], d, d)
    return (wq, bq, wk, bk, wv, bv, wo, bo)


# ----------------------------------------------------------------------------
# Pure-JAX f32 reference mirroring the PyTorch forward (for validation).
# ----------------------------------------------------------------------------
def _mha_ref(q, k, v, mask, params, num_heads):
    wq, bq, wk, bk, wv, bv, wo, bo = params
    B, Sq, D = q.shape
    dh = D // num_heads
    qp = jax.nn.relu(q @ wq + bq)
    kp = jax.nn.relu(k @ wk + bk)
    vp = jax.nn.relu(v @ wv + bv)

    def to_batches(x):
        b, s, _ = x.shape
        return x.reshape(b, s, num_heads, dh).transpose(0, 2, 1, 3).reshape(
            b * num_heads, s, dh)

    qh, kh, vh = to_batches(qp), to_batches(kp), to_batches(vp)
    scores = jnp.einsum('nqd,nkd->nqk', qh, kh) / math.sqrt(dh)
    if mask is not None:
        mask_rep = jnp.tile(mask, (num_heads, 1, 1))   # torch Tensor.repeat
        scores = jnp.where(mask_rep == 0, -1e10, scores)
    attn = jax.nn.softmax(scores, axis=-1)
    yh = attn @ vh
    y = yh.reshape(B, num_heads, Sq, dh).transpose(0, 2, 1, 3).reshape(B, Sq, D)
    y = jax.nn.relu(y @ wo + bo)
    return y, attn


if __name__ == "__main__":
    key = jax.random.PRNGKey(0)
    B, S, D, H = 4, 8, 32, 4     # batch, seq, in_features, head_num

    k_q, k_k, k_v, k_p = jax.random.split(key, 4)
    q = jax.random.normal(k_q, (B, S, D), jnp.float32)
    k = jax.random.normal(k_k, (B, S, D), jnp.float32)
    v = jax.random.normal(k_v, (B, S, D), jnp.float32)
    # gen_history_mask-style causal mask, identical across the batch
    mask = jnp.broadcast_to(jnp.tril(jnp.ones((S, S), jnp.float32)), (B, S, S))

    params = init_mha_params(k_p, D)

    # --- test 1: per-batch causal mask, f32 attention output ------------------
    y, attn = multi_head_attention(q, k, v, mask, params, H, block_b=2)
    jax.block_until_ready((y, attn))

    y_ref, attn_ref = _mha_ref(q, k, v, mask, params, H)
    assert y.shape == (B, S, D) and attn.shape == (B * H, S, S)
    assert jnp.allclose(attn, attn_ref, rtol=5e-2, atol=2e-2), "attention mismatch"
    assert jnp.allclose(y, y_ref, rtol=5e-2, atol=2e-2), "output mismatch"

    # --- test 2: no mask (resident batch-invariant path), bf16 attention ------
    y2, attn2 = multi_head_attention(q, k, v, None, params, H,
                                     block_b=2, attn_dtype=jnp.bfloat16)
    jax.block_until_ready((y2, attn2))
    y2_ref, attn2_ref = _mha_ref(q, k, v, None, params, H)
    assert jnp.allclose(attn2.astype(jnp.float32), attn2_ref,
                        rtol=5e-2, atol=2e-2), "attention mismatch (no mask)"
    assert jnp.allclose(y2, y2_ref, rtol=5e-2, atol=2e-2), "output mismatch (no mask)"

    print("KERNEL_OK")
</pallas_src>

<mosaic_0001>
module attributes {stable_mosaic.version = 11 : i64} {
  func.func @_mha_kernel(%arg0: i32, %arg1: i32, %arg2: memref<2x8x32xbf16, #tpu.memory_space<vmem>>, %arg3: memref<2x8x32xbf16, #tpu.memory_space<vmem>>, %arg4: memref<2x8x32xbf16, #tpu.memory_space<vmem>>, %arg5: memref<2x8x8xi8, #tpu.memory_space<vmem>>, %arg6: memref<32x32xbf16, #tpu.memory_space<vmem>>, %arg7: memref<1x32xf32, #tpu.memory_space<vmem>>, %arg8: memref<32x32xbf16, #tpu.memory_space<vmem>>, %arg9: memref<1x32xf32, #tpu.memory_space<vmem>>, %arg10: memref<32x32xbf16, #tpu.memory_space<vmem>>, %arg11: memref<1x32xf32, #tpu.memory_space<vmem>>, %arg12: memref<32x32xbf16, #tpu.memory_space<vmem>>, %arg13: memref<1x32xf32, #tpu.memory_space<vmem>>, %arg14: memref<2x8x32xf32, #tpu.memory_space<vmem>>, %arg15: memref<2x4x8x8xf32, #tpu.memory_space<vmem>>, %arg16: memref<16x32xbf16, #tpu.memory_space<vmem>>, %arg17: memref<16x32xbf16, #tpu.memory_space<vmem>>, %arg18: memref<16x32xbf16, #tpu.memory_space<vmem>>) attributes {dimension_semantics = [#tpu.dimension_semantics<parallel>, #tpu.dimension_semantics<arbitrary>], iteration_bounds = array<i64: 2, 1>, scalar_prefetch = 0 : i64, scratch_operands = 3 : i64, tpu.core_type = #tpu.core_type<tc>, window_params = [{transform_indices = @transform_0, window_bounds = array<i64: 2, 8, 32>}, {transform_indices = @transform_1, window_bounds = array<i64: 2, 8, 32>}, {transform_indices = @transform_2, window_bounds = array<i64: 2, 8, 32>}, {transform_indices = @transform_3, window_bounds = array<i64: 2, 8, 8>}, {pipeline_mode = #tpu.pipeline_mode<synchronous>, transform_indices = @transform_4, window_bounds = array<i64: 32, 32>}, {pipeline_mode = #tpu.pipeline_mode<synchronous>, transform_indices = @transform_5, window_bounds = array<i64: 1, 32>}, {pipeline_mode = #tpu.pipeline_mode<synchronous>, transform_indices = @transform_6, window_bounds = array<i64: 32, 32>}, {pipeline_mode = #tpu.pipeline_mode<synchronous>, transform_indices = @transform_7, window_bounds = array<i64: 1, 32>}, {pipeline_mode = #tpu.pipeline_mode<synchronous>, transform_indices = @transform_8, window_bounds = array<i64: 32, 32>}, {pipeline_mode = #tpu.pipeline_mode<synchronous>, transform_indices = @transform_9, window_bounds = array<i64: 1, 32>}, {pipeline_mode = #tpu.pipeline_mode<synchronous>, transform_indices = @transform_10, window_bounds = array<i64: 32, 32>}, {pipeline_mode = #tpu.pipeline_mode<synchronous>, transform_indices = @transform_11, window_bounds = array<i64: 1, 32>}, {transform_indices = @transform_12, window_bounds = array<i64: 2, 8, 32>}, {transform_indices = @transform_13, window_bounds = array<i64: 2, 4, 8, 8>}]} {
    %c0_i32 = arith.constant 0 : i32
    %0 = arith.cmpi eq, %arg1, %c0_i32 : i32
    %1 = arith.extui %0 : i1 to i32
    %c0_i32_0 = arith.constant 0 : i32
    %2 = arith.cmpi ne, %1, %c0_i32_0 : i32
    scf.if %2 {
      %c0_49 = arith.constant 0 : index
      %c0_50 = arith.constant 0 : index
      %c0_51 = arith.constant 0 : index
      %97 = vector.load %arg3[%c0_49, %c0_50, %c0_51] : memref<2x8x32xbf16, #tpu.memory_space<vmem>>, vector<2x8x32xbf16>
      %98 = vector.shape_cast %97 : vector<2x8x32xbf16> to vector<16x32xbf16>
      %c0_52 = arith.constant 0 : index
      %c0_53 = arith.constant 0 : index
      %99 = vector.load %arg8[%c0_52, %c0_53] : memref<32x32xbf16, #tpu.memory_space<vmem>>, vector<32x32xbf16>
      %cst_54 = arith.constant dense<0.000000e+00> : vector<16x32xf32>
      %100 = tpu.matmul %98, %99, %cst_54 {dimension_numbers = #tpu.dot_dimension_numbers<[1], [0], [0], [1], [0, 0, 1, 1], [], []>} : vector<16x32xbf16>, vector<32x32xbf16>, vector<16x32xf32> -> vector<16x32xf32>
      %c0_55 = arith.constant 0 : index
      %c0_56 = arith.constant 0 : index
      %101 = vector.load %arg9[%c0_55, %c0_56] : memref<1x32xf32, #tpu.memory_space<vmem>>, vector<1x32xf32>
      %102 = vector.broadcast %101 : vector<1x32xf32> to vector<16x32xf32>
      %103 = arith.addf %100, %102 : vector<16x32xf32>
      %cst_57 = arith.constant 0.000000e+00 : f32
      %104 = vector.broadcast %cst_57 : f32 to vector<16x32xf32>
      %105 = arith.maximumf %103, %104 : vector<16x32xf32>
      %106 = arith.truncf %105 : vector<16x32xf32> to vector<16x32xbf16>
      %c0_58 = arith.constant 0 : index
      %c0_59 = arith.constant 0 : index
      %107 = vector.load %arg16[%c0_58, %c0_59] : memref<16x32xbf16, #tpu.memory_space<vmem>>, vector<16x32xbf16>
      tpu.vector_store %arg16[%c0_58, %c0_59], %106 {strides = array<i32>} : memref<16x32xbf16, #tpu.memory_space<vmem>>, vector<16x32xbf16>,
      %c0_60 = arith.constant 0 : index
      %c0_61 = arith.constant 0 : index
      %c0_62 = arith.constant 0 : index
      %108 = vector.load %arg4[%c0_60, %c0_61, %c0_62] : memref<2x8x32xbf16, #tpu.memory_space<vmem>>, vector<2x8x32xbf16>
      %109 = vector.shape_cast %108 : vector<2x8x32xbf16> to vector<16x32xbf16>
      %c0_63 = arith.constant 0 : index
      %c0_64 = arith.constant 0 : index
      %110 = vector.load %arg10[%c0_63, %c0_64] : memref<32x32xbf16, #tpu.memory_space<vmem>>, vector<32x32xbf16>
      %cst_65 = arith.constant dense<0.000000e+00> : vector<16x32xf32>
      %111 = tpu.matmul %109, %110, %cst_65 {dimension_numbers = #tpu.dot_dimension_numbers<[1], [0], [0], [1], [0, 0, 1, 1], [], []>} : vector<16x32xbf16>, vector<32x32xbf16>, vector<16x32xf32> -> vector<16x32xf32>
      %c0_66 = arith.constant 0 : index
      %c0_67 = arith.constant 0 : index
      %112 = vector.load %arg11[%c0_66, %c0_67] : memref<1x32xf32, #tpu.memory_space<vmem>>, vector<1x32xf32>
      %113 = vector.broadcast %112 : vector<1x32xf32> to vector<16x32xf32>
      %114 = arith.addf %111, %113 : vector<16x32xf32>
      %cst_68 = arith.constant 0.000000e+00 : f32
      %115 = vector.broadcast %cst_68 : f32 to vector<16x32xf32>
      %116 = arith.maximumf %114, %115 : vector<16x32xf32>
      %117 = arith.truncf %116 : vector<16x32xf32> to vector<16x32xbf16>
      %c0_69 = arith.constant 0 : index
      %c0_70 = arith.constant 0 : index
      %118 = vector.load %arg17[%c0_69, %c0_70] : memref<16x32xbf16, #tpu.memory_space<vmem>>, vector<16x32xbf16>
      tpu.vector_store %arg17[%c0_69, %c0_70], %117 {strides = array<i32>} : memref<16x32xbf16, #tpu.memory_space<vmem>>, vector<16x32xbf16>,
    } else {
    }
    %c0 = arith.constant 0 : index
    %c0_1 = arith.constant 0 : index
    %c0_2 = arith.constant 0 : index
    %3 = vector.load %arg2[%c0, %c0_1, %c0_2] : memref<2x8x32xbf16, #tpu.memory_space<vmem>>, vector<2x8x32xbf16>
    %4 = vector.shape_cast %3 : vector<2x8x32xbf16> to vector<16x32xbf16>
    %c0_3 = arith.constant 0 : index
    %c0_4 = arith.constant 0 : index
    %5 = vector.load %arg6[%c0_3, %c0_4] : memref<32x32xbf16, #tpu.memory_space<vmem>>, vector<32x32xbf16>
    %cst = arith.constant dense<0.000000e+00> : vector<16x32xf32>
    %6 = tpu.matmul %4, %5, %cst {dimension_numbers = #tpu.dot_dimension_numbers<[1], [0], [0], [1], [0, 0, 1, 1], [], []>} : vector<16x32xbf16>, vector<32x32xbf16>, vector<16x32xf32> -> vector<16x32xf32>
    %c0_5 = arith.constant 0 : index
    %c0_6 = arith.constant 0 : index
    %7 = vector.load %arg7[%c0_5, %c0_6] : memref<1x32xf32, #tpu.memory_space<vmem>>, vector<1x32xf32>
    %8 = vector.broadcast %7 : vector<1x32xf32> to vector<16x32xf32>
    %9 = arith.addf %6, %8 : vector<16x32xf32>
    %cst_7 = arith.constant 0.000000e+00 : f32
    %10 = vector.broadcast %cst_7 : f32 to vector<16x32xf32>
    %11 = arith.maximumf %9, %10 : vector<16x32xf32>
    %cst_8 = arith.constant 0.353553385 : f32
    %12 = vector.broadcast %cst_8 : f32 to vector<16x32xf32>
    %13 = arith.mulf %11, %12 : vector<16x32xf32>
    %14 = arith.truncf %13 : vector<16x32xf32> to vector<16x32xbf16>
    %15 = vector.shape_cast %14 : vector<16x32xbf16> to vector<2x8x32xbf16>
    %c0_9 = arith.constant 0 : index
    %c0_10 = arith.constant 0 : index
    %16 = vector.load %arg16[%c0_9, %c0_10] : memref<16x32xbf16, #tpu.memory_space<vmem>>, vector<16x32xbf16>
    %17 = vector.shape_cast %16 : vector<16x32xbf16> to vector<2x8x32xbf16>
    %c0_11 = arith.constant 0 : index
    %c0_12 = arith.constant 0 : index
    %18 = vector.load %arg17[%c0_11, %c0_12] : memref<16x32xbf16, #tpu.memory_space<vmem>>, vector<16x32xbf16>
    %19 = vector.shape_cast %18 : vector<16x32xbf16> to vector<2x8x32xbf16>
    %c0_13 = arith.constant 0 : index
    %c0_14 = arith.constant 0 : index
    %c0_15 = arith.constant 0 : index
    %20 = vector.load %arg5[%c0_13, %c0_14, %c0_15] : memref<2x8x8xi8, #tpu.memory_space<vmem>>, vector<2x8x8xi8>
    %21 = arith.sitofp %20 : vector<2x8x8xi8> to vector<2x8x8xf32>
    %cst_16 = arith.constant 1.000000e+00 : f32
    %22 = vector.broadcast %cst_16 : f32 to vector<2x8x8xf32>
    %23 = arith.subf %21, %22 : vector<2x8x8xf32>
    %cst_17 = arith.constant 1.000000e+10 : f32
    %24 = vector.broadcast %cst_17 : f32 to vector<2x8x8xf32>
    %25 = arith.mulf %23, %24 : vector<2x8x8xf32>
    %26 = vector.extract_strided_slice %15 {offsets = [0, 0, 0], sizes = [2, 8, 8], strides = [1, 1, 1]} : vector<2x8x32xbf16> to vector<2x8x8xbf16>
    %27 = vector.extract_strided_slice %17 {offsets = [0, 0, 0], sizes = [2, 8, 8], strides = [1, 1, 1]} : vector<2x8x32xbf16> to vector<2x8x8xbf16>
    "tpu.trace_start"() <{level = 10 : i32, message = "bqd,bkd->bqk"}> : () -> ()
    %cst_18 = arith.constant dense<0.000000e+00> : vector<2x8x8xf32>
    %28 = tpu.matmul %26, %27, %cst_18 {dimension_numbers = #tpu.dot_dimension_numbers<[2], [2], [1], [1], [0, 0, 0, 1, 1, 1], [0], [0]>} : vector<2x8x8xbf16>, vector<2x8x8xbf16>, vector<2x8x8xf32> -> vector<2x8x8xf32>
    "tpu.trace_stop"() : () -> ()
    %29 = vector.extract_strided_slice %15 {offsets = [0, 0, 8], sizes = [2, 8, 8], strides = [1, 1, 1]} : vector<2x8x32xbf16> to vector<2x8x8xbf16>
    %30 = vector.extract_strided_slice %17 {offsets = [0, 0, 8], sizes = [2, 8, 8], strides = [1, 1, 1]} : vector<2x8x32xbf16> to vector<2x8x8xbf16>
    "tpu.trace_start"() <{level = 10 : i32, message = "bqd,bkd->bqk"}> : () -> ()
    %cst_19 = arith.constant dense<0.000000e+00> : vector<2x8x8xf32>
    %31 = tpu.matmul %29, %30, %cst_19 {dimension_numbers = #tpu.dot_dimension_numbers<[2], [2], [1], [1], [0, 0, 0, 1, 1, 1], [0], [0]>} : vector<2x8x8xbf16>, vector<2x8x8xbf16>, vector<2x8x8xf32> -> vector<2x8x8xf32>
    "tpu.trace_stop"() : () -> ()
    %32 = vector.extract_strided_slice %15 {offsets = [0, 0, 16], sizes = [2, 8, 8], strides = [1, 1, 1]} : vector<2x8x32xbf16> to vector<2x8x8xbf16>
    %33 = vector.extract_strided_slice %17 {offsets = [0, 0, 16], sizes = [2, 8, 8], strides = [1, 1, 1]} : vector<2x8x32xbf16> to vector<2x8x8xbf16>
    "tpu.trace_start"() <{level = 10 : i32, message = "bqd,bkd->bqk"}> : () -> ()
    %cst_20 = arith.constant dense<0.000000e+00> : vector<2x8x8xf32>
    %34 = tpu.matmul %32, %33, %cst_20 {dimension_numbers = #tpu.dot_dimension_numbers<[2], [2], [1], [1], [0, 0, 0, 1, 1, 1], [0], [0]>} : vector<2x8x8xbf16>, vector<2x8x8xbf16>, vector<2x8x8xf32> -> vector<2x8x8xf32>
    "tpu.trace_stop"() : () -> ()
    %35 = vector.extract_strided_slice %15 {offsets = [0, 0, 24], sizes = [2, 8, 8], strides = [1, 1, 1]} : vector<2x8x32xbf16> to vector<2x8x8xbf16>
    %36 = vector.extract_strided_slice %17 {offsets = [0, 0, 24], sizes = [2, 8, 8], strides = [1, 1, 1]} : vector<2x8x32xbf16> to vector<2x8x8xbf16>
    "tpu.trace_start"() <{level = 10 : i32, message = "bqd,bkd->bqk"}> : () -> ()
    %cst_21 = arith.constant dense<0.000000e+00> : vector<2x8x8xf32>
    %37 = tpu.matmul %35, %36, %cst_21 {dimension_numbers = #tpu.dot_dimension_numbers<[2], [2], [1], [1], [0, 0, 0, 1, 1, 1], [0], [0]>} : vector<2x8x8xbf16>, vector<2x8x8xbf16>, vector<2x8x8xf32> -> vector<2x8x8xf32>
    "tpu.trace_stop"() : () -> ()
    %38 = vector.shape_cast %28 : vector<2x8x8xf32> to vector<2x1x8x8xf32>
    %39 = vector.shape_cast %31 : vector<2x8x8xf32> to vector<2x1x8x8xf32>
    %40 = vector.shape_cast %34 : vector<2x8x8xf32> to vector<2x1x8x8xf32>
    %41 = vector.shape_cast %37 : vector<2x8x8xf32> to vector<2x1x8x8xf32>
    %42 = tpu.concatenate %38, %39, %40, %41 in 1 : vector<2x1x8x8xf32>, vector<2x1x8x8xf32>, vector<2x1x8x8xf32>, vector<2x1x8x8xf32> -> vector<2x4x8x8xf32>
    %43 = vector.shape_cast %25 : vector<2x8x8xf32> to vector<2x1x8x8xf32>
    %44 = vector.broadcast %43 : vector<2x1x8x8xf32> to vector<2x4x8x8xf32>
    %45 = arith.addf %42, %44 : vector<2x4x8x8xf32>
    %cst_22 = arith.constant dense<0xFF800000> : vector<2x4x8xf32>
    %46 = vector.multi_reduction <maximumf>, %45, %cst_22 [3] : vector<2x4x8x8xf32> to vector<2x4x8xf32>
    %47 = vector.shape_cast %46 : vector<2x4x8xf32> to vector<2x4x8x1xf32>
    %48 = vector.broadcast %47 : vector<2x4x8x1xf32> to vector<2x4x8x8xf32>
    %49 = arith.subf %45, %48 : vector<2x4x8x8xf32>
    %50 = math.exp %49 : vector<2x4x8x8xf32>
    %cst_23 = arith.constant dense<0.000000e+00> : vector<2x4x8xf32>
    %51 = vector.multi_reduction <add>, %50, %cst_23 [3] : vector<2x4x8x8xf32> to vector<2x4x8xf32>
    %52 = vector.shape_cast %51 : vector<2x4x8xf32> to vector<2x4x8x1xf32>
    %cst_24 = arith.constant 1.000000e+00 : f32
    %53 = vector.broadcast %cst_24 : f32 to vector<2x4x8x1xf32>
    %54 = arith.divf %53, %52 : vector<2x4x8x1xf32>
    %55 = vector.broadcast %54 : vector<2x4x8x1xf32> to vector<2x4x8x8xf32>
    %56 = arith.mulf %50, %55 : vector<2x4x8x8xf32>
    %c0_25 = arith.constant 0 : index
    %c0_26 = arith.constant 0 : index
    %c0_27 = arith.constant 0 : index
    %c0_28 = arith.constant 0 : index
    %57 = vector.load %arg15[%c0_25, %c0_26, %c0_27, %c0_28] : memref<2x4x8x8xf32, #tpu.memory_space<vmem>>, vector<2x4x8x8xf32>
    tpu.vector_store %arg15[%c0_25, %c0_26, %c0_27, %c0_28], %56 {strides = array<i32>} : memref<2x4x8x8xf32, #tpu.memory_space<vmem>>, vector<2x4x8x8xf32>,
    %58 = arith.truncf %56 : vector<2x4x8x8xf32> to vector<2x4x8x8xbf16>
    %59 = vector.extract_strided_slice %58 {offsets = [0, 0, 0, 0], sizes = [2, 1, 8, 8], strides = [1, 1, 1, 1]} : vector<2x4x8x8xbf16> to vector<2x1x8x8xbf16>
    %60 = vector.shape_cast %59 : vector<2x1x8x8xbf16> to vector<2x8x8xbf16>
    %61 = vector.extract_strided_slice %19 {offsets = [0, 0, 0], sizes = [2, 8, 8], strides = [1, 1, 1]} : vector<2x8x32xbf16> to vector<2x8x8xbf16>
    "tpu.trace_start"() <{level = 10 : i32, message = "bqk,bkd->bqd"}> : () -> ()
    %cst_29 = arith.constant dense<0.000000e+00> : vector<2x8x8xf32>
    %62 = tpu.matmul %60, %61, %cst_29 {dimension_numbers = #tpu.dot_dimension_numbers<[2], [1], [1], [2], [0, 0, 0, 1, 1, 2], [0], [0]>} : vector<2x8x8xbf16>, vector<2x8x8xbf16>, vector<2x8x8xf32> -> vector<2x8x8xf32>
    "tpu.trace_stop"() : () -> ()
    %63 = vector.shape_cast %62 : vector<2x8x8xf32> to vector<16x8xf32>
    %64 = arith.truncf %63 : vector<16x8xf32> to vector<16x8xbf16>
    %c0_30 = arith.constant 0 : index
    %c0_31 = arith.constant 0 : index
    %65 = vector.load %arg18[%c0_30, %c0_31] : memref<16x32xbf16, #tpu.memory_space<vmem>>, vector<16x8xbf16>
    tpu.vector_store %arg18[%c0_30, %c0_31], %64 {strides = array<i32>} : memref<16x32xbf16, #tpu.memory_space<vmem>>, vector<16x8xbf16>,
    %66 = vector.extract_strided_slice %58 {offsets = [0, 1, 0, 0], sizes = [2, 1, 8, 8], strides = [1, 1, 1, 1]} : vector<2x4x8x8xbf16> to vector<2x1x8x8xbf16>
    %67 = vector.shape_cast %66 : vector<2x1x8x8xbf16> to vector<2x8x8xbf16>
    %68 = vector.extract_strided_slice %19 {offsets = [0, 0, 8], sizes = [2, 8, 8], strides = [1, 1, 1]} : vector<2x8x32xbf16> to vector<2x8x8xbf16>
    "tpu.trace_start"() <{level = 10 : i32, message = "bqk,bkd->bqd"}> : () -> ()
    %cst_32 = arith.constant dense<0.000000e+00> : vector<2x8x8xf32>
    %69 = tpu.matmul %67, %68, %cst_32 {dimension_numbers = #tpu.dot_dimension_numbers<[2], [1], [1], [2], [0, 0, 0, 1, 1, 2], [0], [0]>} : vector<2x8x8xbf16>, vector<2x8x8xbf16>, vector<2x8x8xf32> -> vector<2x8x8xf32>
    "tpu.trace_stop"() : () -> ()
    %70 = vector.shape_cast %69 : vector<2x8x8xf32> to vector<16x8xf32>
    %71 = arith.truncf %70 : vector<16x8xf32> to vector<16x8xbf16>
    %c0_33 = arith.constant 0 : index
    %c8 = arith.constant 8 : index
    %72 = vector.load %arg18[%c0_33, %c8] : memref<16x32xbf16, #tpu.memory_space<vmem>>, vector<16x8xbf16>
    tpu.vector_store %arg18[%c0_33, %c8], %71 {strides = array<i32>} : memref<16x32xbf16, #tpu.memory_space<vmem>>, vector<16x8xbf16>,
    %73 = vector.extract_strided_slice %58 {offsets = [0, 2, 0, 0], sizes = [2, 1, 8, 8], strides = [1, 1, 1, 1]} : vector<2x4x8x8xbf16> to vector<2x1x8x8xbf16>
    %74 = vector.shape_cast %73 : vector<2x1x8x8xbf16> to vector<2x8x8xbf16>
    %75 = vector.extract_strided_slice %19 {offsets = [0, 0, 16], sizes = [2, 8, 8], strides = [1, 1, 1]} : vector<2x8x32xbf16> to vector<2x8x8xbf16>
    "tpu.trace_start"() <{level = 10 : i32, message = "bqk,bkd->bqd"}> : () -> ()
    %cst_34 = arith.constant dense<0.000000e+00> : vector<2x8x8xf32>
    %76 = tpu.matmul %74, %75, %cst_34 {dimension_numbers = #tpu.dot_dimension_numbers<[2], [1], [1], [2], [0, 0, 0, 1, 1, 2], [0], [0]>} : vector<2x8x8xbf16>, vector<2x8x8xbf16>, vector<2x8x8xf32> -> vector<2x8x8xf32>
    "tpu.trace_stop"() : () -> ()
    %77 = vector.shape_cast %76 : vector<2x8x8xf32> to vector<16x8xf32>
    %78 = arith.truncf %77 : vector<16x8xf32> to vector<16x8xbf16>
    %c0_35 = arith.constant 0 : index
    %c16 = arith.constant 16 : index
    %79 = vector.load %arg18[%c0_35, %c16] : memref<16x32xbf16, #tpu.memory_space<vmem>>, vector<16x8xbf16>
    tpu.vector_store %arg18[%c0_35, %c16], %78 {strides = array<i32>} : memref<16x32xbf16, #tpu.memory_space<vmem>>, vector<16x8xbf16>,
    %80 = vector.extract_strided_slice %58 {offsets = [0, 3, 0, 0], sizes = [2, 1, 8, 8], strides = [1, 1, 1, 1]} : vector<2x4x8x8xbf16> to vector<2x1x8x8xbf16>
    %81 = vector.shape_cast %80 : vector<2x1x8x8xbf16> to vector<2x8x8xbf16>
    %82 = vector.extract_strided_slice %19 {offsets = [0, 0, 24], sizes = [2, 8, 8], strides = [1, 1, 1]} : vector<2x8x32xbf16> to vector<2x8x8xbf16>
    "tpu.trace_start"() <{level = 10 : i32, message = "bqk,bkd->bqd"}> : () -> ()
    %cst_36 = arith.constant dense<0.000000e+00> : vector<2x8x8xf32>
    %83 = tpu.matmul %81, %82, %cst_36 {dimension_numbers = #tpu.dot_dimension_numbers<[2], [1], [1], [2], [0, 0, 0, 1, 1, 2], [0], [0]>} : vector<2x8x8xbf16>, vector<2x8x8xbf16>, vector<2x8x8xf32> -> vector<2x8x8xf32>
    "tpu.trace_stop"() : () -> ()
    %84 = vector.shape_cast %83 : vector<2x8x8xf32> to vector<16x8xf32>
    %85 = arith.truncf %84 : vector<16x8xf32> to vector<16x8xbf16>
    %c0_37 = arith.constant 0 : index
    %c24 = arith.constant 24 : index
    %86 = vector.load %arg18[%c0_37, %c24] : memref<16x32xbf16, #tpu.memory_space<vmem>>, vector<16x8xbf16>
    tpu.vector_store %arg18[%c0_37, %c24], %85 {strides = array<i32>} : memref<16x32xbf16, #tpu.memory_space<vmem>>, vector<16x8xbf16>,
    %c0_38 = arith.constant 0 : index
    %c0_39 = arith.constant 0 : index
    %87 = vector.load %arg18[%c0_38, %c0_39] : memref<16x32xbf16, #tpu.memory_space<vmem>>, vector<16x32xbf16>
    %c0_40 = arith.constant 0 : index
    %c0_41 = arith.constant 0 : index
    %88 = vector.load %arg12[%c0_40, %c0_41] : memref<32x32xbf16, #tpu.memory_space<vmem>>, vector<32x32xbf16>
    %cst_42 = arith.constant dense<0.000000e+00> : vector<16x32xf32>
    %89 = tpu.matmul %87, %88, %cst_42 {dimension_numbers = #tpu.dot_dimension_numbers<[1], [0], [0], [1], [0, 0, 1, 1], [], []>} : vector<16x32xbf16>, vector<32x32xbf16>, vector<16x32xf32> -> vector<16x32xf32>
    %c0_43 = arith.constant 0 : index
    %c0_44 = arith.constant 0 : index
    %90 = vector.load %arg13[%c0_43, %c0_44] : memref<1x32xf32, #tpu.memory_space<vmem>>, vector<1x32xf32>
    %91 = vector.broadcast %90 : vector<1x32xf32> to vector<16x32xf32>
    %92 = arith.addf %89, %91 : vector<16x32xf32>
    %cst_45 = arith.constant 0.000000e+00 : f32
    %93 = vector.broadcast %cst_45 : f32 to vector<16x32xf32>
    %94 = arith.maximumf %92, %93 : vector<16x32xf32>
    %95 = vector.shape_cast %94 : vector<16x32xf32> to vector<2x8x32xf32>
    %c0_46 = arith.constant 0 : index
    %c0_47 = arith.constant 0 : index
    %c0_48 = arith.constant 0 : index
    %96 = vector.load %arg14[%c0_46, %c0_47, %c0_48] : memref<2x8x32xf32, #tpu.memory_space<vmem>>, vector<2x8x32xf32>
    tpu.vector_store %arg14[%c0_46, %c0_47, %c0_48], %95 {strides = array<i32>} : memref<2x8x32xf32, #tpu.memory_space<vmem>>, vector<2x8x32xf32>,
    return
  }
  func.func @transform_0(%arg0: i32, %arg1: i32) -> (i32, i32, i32) {
    %c0_i32 = arith.constant 0 : i32
    %c0_i32_0 = arith.constant 0 : i32
    return %arg0, %arg1, %c0_i32 : i32, i32, i32
  }
  func.func @transform_1(%arg0: i32, %arg1: i32) -> (i32, i32, i32) {
    %c0_i32 = arith.constant 0 : i32
    %c0_i32_0 = arith.constant 0 : i32
    %c0_i32_1 = arith.constant 0 : i32
    return %arg0, %c0_i32, %c0_i32_0 : i32, i32, i32
  }
  func.func @transform_2(%arg0: i32, %arg1: i32) -> (i32, i32, i32) {
    %c0_i32 = arith.constant 0 : i32
    %c0_i32_0 = arith.constant 0 : i32
    %c0_i32_1 = arith.constant 0 : i32
    return %arg0, %c0_i32, %c0_i32_0 : i32, i32, i32
  }
  func.func @transform_3(%arg0: i32, %arg1: i32) -> (i32, i32, i32) {
    %c0_i32 = arith.constant 0 : i32
    %c0_i32_0 = arith.constant 0 : i32
    return %arg0, %arg1, %c0_i32 : i32, i32, i32
  }
  func.func @transform_4(%arg0: i32, %arg1: i32) -> (i32, i32) {
    %c0_i32 = arith.constant 0 : i32
    %c0_i32_0 = arith.constant 0 : i32
    %c0_i32_1 = arith.constant 0 : i32
    return %c0_i32, %c0_i32_0 : i32, i32
  }
  func.func @transform_5(%arg0: i32, %arg1: i32) -> (i32, i32) {
    %c0_i32 = arith.constant 0 : i32
    %c0_i32_0 = arith.constant 0 : i32
    %c0_i32_1 = arith.constant 0 : i32
    return %c0_i32, %c0_i32_0 : i32, i32
  }
  func.func @transform_6(%arg0: i32, %arg1: i32) -> (i32, i32) {
    %c0_i32 = arith.constant 0 : i32
    %c0_i32_0 = arith.constant 0 : i32
    %c0_i32_1 = arith.constant 0 : i32
    return %c0_i32, %c0_i32_0 : i32, i32
  }
  func.func @transform_7(%arg0: i32, %arg1: i32) -> (i32, i32) {
    %c0_i32 = arith.constant 0 : i32
    %c0_i32_0 = arith.constant 0 : i32
    %c0_i32_1 = arith.constant 0 : i32
    return %c0_i32, %c0_i32_0 : i32, i32
  }
  func.func @transform_8(%arg0: i32, %arg1: i32) -> (i32, i32) {
    %c0_i32 = arith.constant 0 : i32
    %c0_i32_0 = arith.constant 0 : i32
    %c0_i32_1 = arith.constant 0 : i32
    return %c0_i32, %c0_i32_0 : i32, i32
  }
  func.func @transform_9(%arg0: i32, %arg1: i32) -> (i32, i32) {
    %c0_i32 = arith.constant 0 : i32
    %c0_i32_0 = arith.constant 0 : i32
    %c0_i32_1 = arith.constant 0 : i32
    return %c0_i32, %c0_i32_0 : i32, i32
  }
  func.func @transform_10(%arg0: i32, %arg1: i32) -> (i32, i32) {
    %c0_i32 = arith.constant 0 : i32
    %c0_i32_0 = arith.constant 0 : i32
    %c0_i32_1 = arith.constant 0 : i32
    return %c0_i32, %c0_i32_0 : i32, i32
  }
  func.func @transform_11(%arg0: i32, %arg1: i32) -> (i32, i32) {
    %c0_i32 = arith.constant 0 : i32
    %c0_i32_0 = arith.constant 0 : i32
    %c0_i32_1 = arith.constant 0 : i32
    return %c0_i32, %c0_i32_0 : i32, i32
  }
  func.func @transform_12(%arg0: i32, %arg1: i32) -> (i32, i32, i32) {
    %c0_i32 = arith.constant 0 : i32
    %c0_i32_0 = arith.constant 0 : i32
    return %arg0, %arg1, %c0_i32 : i32, i32, i32
  }
  func.func @transform_13(%arg0: i32, %arg1: i32) -> (i32, i32, i32, i32) {
    %c0_i32 = arith.constant 0 : i32
    %c0_i32_0 = arith.constant 0 : i32
    %c0_i32_1 = arith.constant 0 : i32
    return %arg0, %c0_i32, %arg1, %c0_i32_0 : i32, i32, i32, i32
  }
}

</mosaic_0001>

<llo_original>
// kernel: tpu_custom_call.1
$region0: #{tpu_custom_call.1}
  #allocation0 [shape = 'u32[]', space=smem, size = 0x4, offset = 0x4, fixed_abs, tag = 'smem constant byte address 0x4 - core index']
  #allocation1 [shape = 'u32[144,128]{1,0:T(1,128)}', space=vmem, size = 0x12000, scoped, tag = 'internal scratch']
  #allocation2 [shape = 'bf16[16,32]{1,0:T(16,128)(2,1)}', space=vmem, size = 0x1000, scoped, tag = 'scratch operand']
  #allocation3 [shape = 'bf16[16,32]{1,0:T(16,128)(2,1)}', space=vmem, size = 0x1000, scoped, tag = 'scratch operand']
  #allocation4 [shape = 'bf16[16,32]{1,0:T(16,128)(2,1)}', space=vmem, size = 0x1000, scoped, tag = 'scratch operand']
  %s0 = inlined_call_operand.hbm [shape: bf16[4,8,32], index: 0, kind: input, shape index: {}]
  %s1 = inlined_call_operand.hbm [shape: bf16[4,8,32], index: 1, kind: input, shape index: {}]
  %s2 = inlined_call_operand.hbm [shape: bf16[4,8,32], index: 2, kind: input, shape index: {}]
  %s3 = inlined_call_operand.hbm [shape: s8[4,8,8], index: 3, kind: input, shape index: {}]
  %s4 = inlined_call_operand.hbm [shape: bf16[32,32], index: 4, kind: input, shape index: {}]
  %s5 = inlined_call_operand.vmem [shape: f32[1,32], index: 5, kind: input, shape index: {}]
  %s6 = inlined_call_operand.vmem [shape: bf16[32,32], index: 6, kind: input, shape index: {}]
  %s7 = inlined_call_operand.vmem [shape: f32[1,32], index: 7, kind: input, shape index: {}]
  %s8 = inlined_call_operand.hbm [shape: bf16[32,32], index: 8, kind: input, shape index: {}]
  %s9 = inlined_call_operand.hbm [shape: f32[1,32], index: 9, kind: input, shape index: {}]
  %s10 = inlined_call_operand.vmem [shape: bf16[32,32], index: 10, kind: input, shape index: {}]
  %s11 = inlined_call_operand.vmem [shape: f32[1,32], index: 11, kind: input, shape index: {}]
  %s12 = inlined_call_operand.hbm [shape: f32[4,8,32], index: 12, kind: output, shape index: {0}]
  %s13 = inlined_call_operand.hbm [shape: f32[4,4,8,8], index: 13, kind: output, shape index: {1}]
  %14 = xla_tuple %s12, %s13
  %s15 = sld [smem:[#allocation0]]
  $region121: #{tpu_custom_call.1} parent=0
    _
  %s17 = ssub.s32 1, %s15
  %s18 = scalar_select 0, %s17, %s15
  $region1: #{tpu_custom_call.1} parent=0
    #allocation5 [shape = 'u8[8192]{0}', space=vmem, size = 0x2000, scoped, tag = 'input window, operand 0']
    #allocation6 [shape = 's32[2]{0}', space=sflag, size = 0x8, scoped, tag = 'scoped memory for tpu_custom_call.1']
    #allocation7 [shape = 's32[2]{0}', space=sflag, size = 0x8, scoped, tag = 'scoped memory for tpu_custom_call.1']
    #allocation8 [shape = 'u8[8192]{0}', space=vmem, size = 0x2000, scoped, tag = 'input window, operand 1']
    #allocation9 [shape = 's32[2]{0}', space=sflag, size = 0x8, scoped, tag = 'scoped memory for tpu_custom_call.1']
    #allocation10 [shape = 'u8[8192]{0}', space=vmem, size = 0x2000, scoped, tag = 'input window, operand 2']
    #allocation11 [shape = 'u8[4096]{0}', space=vmem, size = 0x1000, scoped, tag = 'input window, operand 3']
    #allocation12 [shape = 's32[2]{0}', space=sflag, size = 0x8, scoped, tag = 'scoped memory for tpu_custom_call.1']
    #allocation13 [shape = 'u8[8192]{0}', space=vmem, size = 0x2000, scoped, tag = 'input window, operand 4, single buffered']
    #allocation14 [shape = 'u8[8192]{0}', space=vmem, size = 0x2000, scoped, tag = 'input window, operand 8, single buffered']
    #allocation15 [shape = 's32[1]{0}', space=sflag, size = 0x4, scoped, tag = 'scoped memory for tpu_custom_call.1']
    #allocation16 [shape = 'u8[512]{0}', space=vmem, size = 0x400, scoped, tag = 'input window, operand 9, single buffered']
    #allocation17 [shape = 'u8[16384]{0}', space=vmem, size = 0x4000, scoped, tag = 'output window, operand 0']
    #allocation18 [shape = 'u8[65536]{0}', space=vmem, size = 0x10000, scoped, tag = 'output window, operand 1']
    #allocation19 [shape = 's32[2]{0}', space=sflag, size = 0x8, scoped, tag = 'scoped memory for tpu_custom_call.1']
    %19 = vsyncpa [#allocation6], 0
    %s20 = scalar_lea.sflag [#allocation6], 1
    %21 = vsyncpa %s20, 0
    %22 = vsyncpa [#allocation9], 0
    %s23 = scalar_lea.sflag [#allocation9], 1
    %24 = vsyncpa %s23, 0
    %25 = vsyncpa [#allocation12], 0
    %s26 = scalar_lea.sflag [#allocation12], 1
    %27 = vsyncpa %s26, 0
    %28 = vsyncpa [#allocation15], 0
    %29 = vsyncpa [#allocation7], 0
    %s30 = scalar_lea.sflag [#allocation7], 1
    %31 = vsyncpa %s30, 0
    %32 = vsyncpa [#allocation19], 0
    %s33 = scalar_lea.sflag [#allocation19], 1
    %34 = vsyncpa %s33, 0
    loop: start=0, step=1, limit=4
    $region2: #{tpu_custom_call.1} parent=1 // loop_pre_header
      _
    $region3: #{tpu_custom_call.1} parent=1 // loop_header
      %s36 = sphi 0, %s40
      %p37 = scmp.ge.s32.totalorder %s36, 4
      %s43 = sphi 0, %s55
      %s44 = sphi 0, %s51
      %s45 = sphi 0, %s43
      %s46 = sphi 0, %s44
      %s47 = sphi 0, %s45
      %s48 = sphi 0, %s46
      %s60 = sphi 0, %s62
      %s63 = sphi 0, %s60
      %s64 = sphi 0, %s63
      %s80 = sphi 0, %s64
      %s86 = sphi 0, %s88
      %s89 = sphi 0, %s86
      %s90 = sphi 0, %s89
      %s106 = sphi 0, %s90
      %s112 = sphi 0, %s114
      %s115 = sphi 0, %s112
      %s116 = sphi 0, %s115
      %s132 = sphi 0, %s116
      %s140 = sphi 0, %s142
      %s143 = sphi 0, %s140
      %s144 = sphi 0, %s143
      %s160 = sphi 0, %s144
      %s164 = sphi 0, %s164
      %s166 = sphi 0, %s164
      %s167 = sphi 0, %s166
      %s181 = sphi 0, %s167
      %s185 = sphi 0, %s185
      %s187 = sphi 0, %s185
      %s188 = sphi 0, %s187
      %s202 = sphi 0, %s188
      %s206 = sphi 0, %s206
      %s208 = sphi 0, %s206
      %s209 = sphi 0, %s208
      %s223 = sphi 0, %s209
      %s227 = sphi 0, %s227
      %s229 = sphi 0, %s227
      %s230 = sphi 0, %s229
      %s244 = sphi 0, %s230
      %s248 = sphi 0, %s248
      %s250 = sphi 0, %s248
      %s251 = sphi 0, %s250
      %s265 = sphi 0, %s251
      %s269 = sphi 0, %s269
      %s271 = sphi 0, %s269
      %s272 = sphi 0, %s271
      %s286 = sphi 0, %s272
      %s290 = sphi 0, %s290
      %s292 = sphi 0, %s290
      %s293 = sphi 0, %s292
      %s307 = sphi 0, %s293
      %s311 = sphi 0, %s311
      %s313 = sphi 0, %s311
      %s314 = sphi 0, %s313
      %s328 = sphi 0, %s314
      %s336 = sphi 0, %s338
      %s339 = sphi 0, %s336
      %s340 = sphi 0, %s339
      %s356 = sphi 0, %s340
      %s364 = sphi 0, %s366
      %s367 = sphi 0, %s364
      %s368 = sphi 0, %s367
      %s384 = sphi 0, %s368
    $region4: #{tpu_custom_call.1} parent=1 // loop_header_branch
      %39 = sbr.rel (%p37) target = $region8
    $region5: #{tpu_custom_call.1} parent=1 // loop_body
      %s41 = ssub.s32 %s36, 1
      %s42 = ssub.s32 %s36, 2
      %s49 = sadd.s32 1, %s44
      %p50 = scmp.ge.s32.totalorder %s49, 1
      %s51 = scalar_select %p50, 0, %s49
      %s52 = sadd.s32 1, %s43
      %s53 = scalar_select %p50, %s52, %s43
      %p54 = scmp.ge.s32.totalorder %s53, 2
      %s55 = scalar_select %p54, 0, %s53
      %s56 = ssub.s32 %s43, %s55
      %s57 = ssub.s32 %s44, %s51
      %s58 = sor.u32 %s56, %s57
      %p59 = scmp.eq.s32.totalorder %s58, 0
      %s61 = sadd.s32 %s60, 1
      %s62 = scalar_select %p59, %s60, %s61
      %p65 = pneg %p59
      %p66 = scmp.eq.s32.totalorder %s36, 1
      %p67 = por %p65, %p66
      %p68 = scmp.ne.s32.totalorder %s60, %s63
      %p69 = scmp.eq.s32.totalorder %s36, 0
      %p70 = por %p68, %p69
      %p71 = scmp.ne.s32.totalorder %s60, %s63
      %p72 = scmp.eq.s32.totalorder %s41, 1
      %p73 = por %p71, %p72
      %p74 = scmp.ne.s32.totalorder %s63, %s64
      %p75 = scmp.eq.s32.totalorder %s41, 0
      %p76 = por %p74, %p75
      %p77 = scmp.ne.s32.totalorder %s63, %s64
      %p78 = scmp.eq.s32.totalorder %s42, 1
      %p79 = por %p77, %p78
      %p81 = scmp.ne.s32.totalorder %s64, %s80
      %p82 = scmp.eq.s32.totalorder %s42, 0
      %p83 = por %p81, %p82
      %s84 = ssub.s32 %s43, %s55
      %p85 = scmp.eq.s32.totalorder %s84, 0
      %s87 = sadd.s32 %s86, 1
      %s88 = scalar_select %p85, %s86, %s87
      %p91 = pneg %p85
      %p92 = scmp.eq.s32.totalorder %s36, 1
      %p93 = por %p91, %p92
      %p94 = scmp.ne.s32.totalorder %s86, %s89
      %p95 = scmp.eq.s32.totalorder %s36, 0
      %p96 = por %p94, %p95
      %p97 = scmp.ne.s32.totalorder %s86, %s89
      %p98 = scmp.eq.s32.totalorder %s41, 1
      %p99 = por %p97, %p98
      %p100 = scmp.ne.s32.totalorder %s89, %s90
      %p101 = scmp.eq.s32.totalorder %s41, 0
      %p102 = por %p100, %p101
      %p103 = scmp.ne.s32.totalorder %s89, %s90
      %p104 = scmp.eq.s32.totalorder %s42, 1
      %p105 = por %p103, %p104
      %p107 = scmp.ne.s32.totalorder %s90, %s106
      %p108 = scmp.eq.s32.totalorder %s42, 0
      %p109 = por %p107, %p108
      %s110 = ssub.s32 %s43, %s55
      %p111 = scmp.eq.s32.totalorder %s110, 0
      %s113 = sadd.s32 %s112, 1
      %s114 = scalar_select %p111, %s112, %s113
      %p117 = pneg %p111
      %p118 = scmp.eq.s32.totalorder %s36, 1
      %p119 = por %p117, %p118
      %p120 = scmp.ne.s32.totalorder %s112, %s115
      %p121 = scmp.eq.s32.totalorder %s36, 0
      %p122 = por %p120, %p121
      %p123 = scmp.ne.s32.totalorder %s112, %s115
      %p124 = scmp.eq.s32.totalorder %s41, 1
      %p125 = por %p123, %p124
      %p126 = scmp.ne.s32.totalorder %s115, %s116
      %p127 = scmp.eq.s32.totalorder %s41, 0
      %p128 = por %p126, %p127
      %p129 = scmp.ne.s32.totalorder %s115, %s116
      %p130 = scmp.eq.s32.totalorder %s42, 1
      %p131 = por %p129, %p130
      %p133 = scmp.ne.s32.totalorder %s116, %s132
      %p134 = scmp.eq.s32.totalorder %s42, 0
      %p135 = por %p133, %p134
      %s136 = ssub.s32 %s43, %s55
      %s137 = ssub.s32 %s44, %s51
      %s138 = sor.u32 %s136, %s137
      %p139 = scmp.eq.s32.totalorder %s138, 0
      %s141 = sadd.s32 %s140, 1
      %s142 = scalar_select %p139, %s140, %s141
      %p145 = pneg %p139
      %p146 = scmp.eq.s32.totalorder %s36, 1
      %p147 = por %p145, %p146
      %p148 = scmp.ne.s32.totalorder %s140, %s143
      %p149 = scmp.eq.s32.totalorder %s36, 0
      %p150 = por %p148, %p149
      %p151 = scmp.ne.s32.totalorder %s140, %s143
      %p152 = scmp.eq.s32.totalorder %s41, 1
      %p153 = por %p151, %p152
      %p154 = scmp.ne.s32.totalorder %s143, %s144
      %p155 = scmp.eq.s32.totalorder %s41, 0
      %p156 = por %p154, %p155
      %p157 = scmp.ne.s32.totalorder %s143, %s144
      %p158 = scmp.eq.s32.totalorder %s42, 1
      %p159 = por %p157, %p158
      %p161 = scmp.ne.s32.totalorder %s144, %s160
      %p162 = scmp.eq.s32.totalorder %s42, 0
      %p163 = por %p161, %p162
      %s165 = sadd.s32 %s164, 1
      %p168 = scmp.eq.s32.totalorder %s36, 1
      %p169 = scmp.ne.s32.totalorder %s164, %s166
      %p170 = scmp.eq.s32.totalorder %s36, 0
      %p171 = por %p169, %p170
      %p172 = scmp.ne.s32.totalorder %s164, %s166
      %p173 = scmp.eq.s32.totalorder %s41, 1
      %p174 = por %p172, %p173
      %p175 = scmp.ne.s32.totalorder %s166, %s167
      %p176 = scmp.eq.s32.totalorder %s41, 0
      %p177 = por %p175, %p176
      %p178 = scmp.ne.s32.totalorder %s166, %s167
      %p179 = scmp.eq.s32.totalorder %s42, 1
      %p180 = por %p178, %p179
      %p182 = scmp.ne.s32.totalorder %s167, %s181
      %p183 = scmp.eq.s32.totalorder %s42, 0
      %p184 = por %p182, %p183
      %s186 = sadd.s32 %s185, 1
      %p189 = scmp.eq.s32.totalorder %s36, 1
      %p190 = scmp.ne.s32.totalorder %s185, %s187
      %p191 = scmp.eq.s32.totalorder %s36, 0
      %p192 = por %p190, %p191
      %p193 = scmp.ne.s32.totalorder %s185, %s187
      %p194 = scmp.eq.s32.totalorder %s41, 1
      %p195 = por %p193, %p194
      %p196 = scmp.ne.s32.totalorder %s187, %s188
      %p197 = scmp.eq.s32.totalorder %s41, 0
      %p198 = por %p196, %p197
      %p199 = scmp.ne.s32.totalorder %s187, %s188
      %p200 = scmp.eq.s32.totalorder %s42, 1
      %p201 = por %p199, %p200
      %p203 = scmp.ne.s32.totalorder %s188, %s202
      %p204 = scmp.eq.s32.totalorder %s42, 0
      %p205 = por %p203, %p204
      %s207 = sadd.s32 %s206, 1
      %p210 = scmp.eq.s32.totalorder %s36, 1
      %p211 = scmp.ne.s32.totalorder %s206, %s208
      %p212 = scmp.eq.s32.totalorder %s36, 0
      %p213 = por %p211, %p212
      %p214 = scmp.ne.s32.totalorder %s206, %s208
      %p215 = scmp.eq.s32.totalorder %s41, 1
      %p216 = por %p214, %p215
      %p217 = scmp.ne.s32.totalorder %s208, %s209
      %p218 = scmp.eq.s32.totalorder %s41, 0
      %p219 = por %p217, %p218
      %p220 = scmp.ne.s32.totalorder %s208, %s209
      %p221 = scmp.eq.s32.totalorder %s42, 1
      %p222 = por %p220, %p221
      %p224 = scmp.ne.s32.totalorder %s209, %s223
      %p225 = scmp.eq.s32.totalorder %s42, 0
      %p226 = por %p224, %p225
      %s228 = sadd.s32 %s227, 1
      %p231 = scmp.eq.s32.totalorder %s36, 1
      %p232 = scmp.ne.s32.totalorder %s227, %s229
      %p233 = scmp.eq.s32.totalorder %s36, 0
      %p234 = por %p232, %p233
      %p235 = scmp.ne.s32.totalorder %s227, %s229
      %p236 = scmp.eq.s32.totalorder %s41, 1
      %p237 = por %p235, %p236
      %p238 = scmp.ne.s32.totalorder %s229, %s230
      %p239 = scmp.eq.s32.totalorder %s41, 0
      %p240 = por %p238, %p239
      %p241 = scmp.ne.s32.totalorder %s229, %s230
      %p242 = scmp.eq.s32.totalorder %s42, 1
      %p243 = por %p241, %p242
      %p245 = scmp.ne.s32.totalorder %s230, %s244
      %p246 = scmp.eq.s32.totalorder %s42, 0
      %p247 = por %p245, %p246
      %s249 = sadd.s32 %s248, 1
      %p252 = scmp.eq.s32.totalorder %s36, 1
      %p253 = scmp.ne.s32.totalorder %s248, %s250
      %p254 = scmp.eq.s32.totalorder %s36, 0
      %p255 = por %p253, %p254
      %p256 = scmp.ne.s32.totalorder %s248, %s250
      %p257 = scmp.eq.s32.totalorder %s41, 1
      %p258 = por %p256, %p257
      %p259 = scmp.ne.s32.totalorder %s250, %s251
      %p260 = scmp.eq.s32.totalorder %s41, 0
      %p261 = por %p259, %p260
      %p262 = scmp.ne.s32.totalorder %s250, %s251
      %p263 = scmp.eq.s32.totalorder %s42, 1
      %p264 = por %p262, %p263
      %p266 = scmp.ne.s32.totalorder %s251, %s265
      %p267 = scmp.eq.s32.totalorder %s42, 0
      %p268 = por %p266, %p267
      %s270 = sadd.s32 %s269, 1
      %p273 = scmp.eq.s32.totalorder %s36, 1
      %p274 = scmp.ne.s32.totalorder %s269, %s271
      %p275 = scmp.eq.s32.totalorder %s36, 0
      %p276 = por %p274, %p275
      %p277 = scmp.ne.s32.totalorder %s269, %s271
      %p278 = scmp.eq.s32.totalorder %s41, 1
      %p279 = por %p277, %p278
      %p280 = scmp.ne.s32.totalorder %s271, %s272
      %p281 = scmp.eq.s32.totalorder %s41, 0
      %p282 = por %p280, %p281
      %p283 = scmp.ne.s32.totalorder %s271, %s272
      %p284 = scmp.eq.s32.totalorder %s42, 1
      %p285 = por %p283, %p284
      %p287 = scmp.ne.s32.totalorder %s272, %s286
      %p288 = scmp.eq.s32.totalorder %s42, 0
      %p289 = por %p287, %p288
      %s291 = sadd.s32 %s290, 1
      %p294 = scmp.eq.s32.totalorder %s36, 1
      %p295 = scmp.ne.s32.totalorder %s290, %s292
      %p296 = scmp.eq.s32.totalorder %s36, 0
      %p297 = por %p295, %p296
      %p298 = scmp.ne.s32.totalorder %s290, %s292
      %p299 = scmp.eq.s32.totalorder %s41, 1
      %p300 = por %p298, %p299
      %p301 = scmp.ne.s32.totalorder %s292, %s293
      %p302 = scmp.eq.s32.totalorder %s41, 0
      %p303 = por %p301, %p302
      %p304 = scmp.ne.s32.totalorder %s292, %s293
      %p305 = scmp.eq.s32.totalorder %s42, 1
      %p306 = por %p304, %p305
      %p308 = scmp.ne.s32.totalorder %s293, %s307
      %p309 = scmp.eq.s32.totalorder %s42, 0
      %p310 = por %p308, %p309
      %s312 = sadd.s32 %s311, 1
      %p315 = scmp.eq.s32.totalorder %s36, 1
      %p316 = scmp.ne.s32.totalorder %s311, %s313
      %p317 = scmp.eq.s32.totalorder %s36, 0
      %p318 = por %p316, %p317
      %p319 = scmp.ne.s32.totalorder %s311, %s313
      %p320 = scmp.eq.s32.totalorder %s41, 1
      %p321 = por %p319, %p320
      %p322 = scmp.ne.s32.totalorder %s313, %s314
      %p323 = scmp.eq.s32.totalorder %s41, 0
      %p324 = por %p322, %p323
      %p325 = scmp.ne.s32.totalorder %s313, %s314
      %p326 = scmp.eq.s32.totalorder %s42, 1
      %p327 = por %p325, %p326
      %p329 = scmp.ne.s32.totalorder %s314, %s328
      %p330 = scmp.eq.s32.totalorder %s42, 0
      %p331 = por %p329, %p330
      %s332 = ssub.s32 %s43, %s55
      %s333 = ssub.s32 %s44, %s51
      %s334 = sor.u32 %s332, %s333
      %p335 = scmp.eq.s32.totalorder %s334, 0
      %s337 = sadd.s32 %s336, 1
      %s338 = scalar_select %p335, %s336, %s337
      %p341 = pneg %p335
      %p342 = scmp.eq.s32.totalorder %s36, 1
      %p343 = por %p341, %p342
      %p344 = scmp.ne.s32.totalorder %s336, %s339
      %p345 = scmp.eq.s32.totalorder %s36, 0
      %p346 = por %p344, %p345
      %p347 = scmp.ne.s32.totalorder %s336, %s339
      %p348 = scmp.eq.s32.totalorder %s41, 1
      %p349 = por %p347, %p348
      %p350 = scmp.ne.s32.totalorder %s339, %s340
      %p351 = scmp.eq.s32.totalorder %s41, 0
      %p352 = por %p350, %p351
      %p353 = scmp.ne.s32.totalorder %s339, %s340
      %p354 = scmp.eq.s32.totalorder %s42, 1
      %p355 = por %p353, %p354
      %p357 = scmp.ne.s32.totalorder %s340, %s356
      %p358 = scmp.eq.s32.totalorder %s42, 0
      %p359 = por %p357, %p358
      %s360 = ssub.s32 %s43, %s55
      %s361 = ssub.s32 %s44, %s51
      %s362 = sor.u32 %s360, %s361
      %p363 = scmp.eq.s32.totalorder %s362, 0
      %s365 = sadd.s32 %s364, 1
      %s366 = scalar_select %p363, %s364, %s365
      %p369 = pneg %p363
      %p370 = scmp.eq.s32.totalorder %s36, 1
      %p371 = por %p369, %p370
      %p372 = scmp.ne.s32.totalorder %s364, %s367
      %p373 = scmp.eq.s32.totalorder %s36, 0
      %p374 = por %p372, %p373
      %p375 = scmp.ne.s32.totalorder %s364, %s367
      %p376 = scmp.eq.s32.totalorder %s41, 1
      %p377 = por %p375, %p376
      %p378 = scmp.ne.s32.totalorder %s367, %s368
      %p379 = scmp.eq.s32.totalorder %s41, 0
      %p380 = por %p378, %p379
      %p381 = scmp.ne.s32.totalorder %s367, %s368
      %p382 = scmp.eq.s32.totalorder %s42, 1
      %p383 = por %p381, %p382
      %p385 = scmp.ne.s32.totalorder %s368, %s384
      %p386 = scmp.eq.s32.totalorder %s42, 0
      %p387 = por %p385, %p386
      %p388 = scmp.le.s32.totalorder 1, %s36
      %p389 = scmp.lt.s32.totalorder %s36, 3
      %p390 = pnand %p388, %p389
      %p391 = pneg %p390
      // Predicated region
      $region9: #{tpu_custom_call.1} parent=5 // pred_check
        _
      $region10: #{tpu_custom_call.1} parent=5 // pred_check_branch
        %393 = sbr.rel (%p390) target = $region12
      $region11: #{tpu_custom_call.1} parent=5 // pred_region
        %s394 = ssub.s32 %s36, 1
        // Predicated region
        $region13: #{tpu_custom_call.1} parent=11 // pred_check
          %p395 = pneg %p177
        $region14: #{tpu_custom_call.1} parent=11 // pred_check_branch
          %397 = sbr.rel (%p395) target = $region16
        $region15: #{tpu_custom_call.1} parent=11 // pred_region
          %s399 = ssub.s32 256, 256
          %400 = vsyncadd [#allocation12], %s399
          %s401 = sshll.u32 [#allocation13], 4
          %s402 = int_to_ptr.vmem [resolvable:$true] %s401
          %407 = dma.hbm_to_vmem [thread:$0]  %s4, 256, %s402, [#allocation12], 64, 64, 4
        $region16: #{tpu_custom_call.1} parent=11 // pred_fallthru
          _
        // Predicated region
        $region17: #{tpu_custom_call.1} parent=11 // pred_check
          %p408 = pneg %p198
        $region18: #{tpu_custom_call.1} parent=11 // pred_check_branch
          %410 = sbr.rel (%p408) target = $region20
        $region19: #{tpu_custom_call.1} parent=11 // pred_region
          _
        $region20: #{tpu_custom_call.1} parent=11 // pred_fallthru
          _
        // Predicated region
        $region21: #{tpu_custom_call.1} parent=11 // pred_check
          %p411 = pneg %p219
        $region22: #{tpu_custom_call.1} parent=11 // pred_check_branch
          %413 = sbr.rel (%p411) target = $region24
        $region23: #{tpu_custom_call.1} parent=11 // pred_region
          _
        $region24: #{tpu_custom_call.1} parent=11 // pred_fallthru
          _
        // Predicated region
        $region25: #{tpu_custom_call.1} parent=11 // pred_check
          %p414 = pneg %p240
        $region26: #{tpu_custom_call.1} parent=11 // pred_check_branch
          %416 = sbr.rel (%p414) target = $region28
        $region27: #{tpu_custom_call.1} parent=11 // pred_region
          _
        $region28: #{tpu_custom_call.1} parent=11 // pred_fallthru
          _
        // Predicated region
        $region29: #{tpu_custom_call.1} parent=11 // pred_check
          %p417 = pneg %p261
        $region30: #{tpu_custom_call.1} parent=11 // pred_check_branch
          %419 = sbr.rel (%p417) target = $region32
        $region31: #{tpu_custom_call.1} parent=11 // pred_region
          %s421 = ssub.s32 256, 256
          %422 = vsyncadd [#allocation15], %s421
          %s423 = sshll.u32 [#allocation14], 4
          %s424 = int_to_ptr.vmem [resolvable:$true] %s423
          %429 = dma.hbm_to_vmem [thread:$0]  %s8, 256, %s424, [#allocation15], 64, 64, 4
        $region32: #{tpu_custom_call.1} parent=11 // pred_fallthru
          _
        // Predicated region
        $region33: #{tpu_custom_call.1} parent=11 // pred_check
          %p430 = pneg %p282
        $region34: #{tpu_custom_call.1} parent=11 // pred_check_branch
          %432 = sbr.rel (%p430) target = $region36
        $region35: #{tpu_custom_call.1} parent=11 // pred_region
          %s434 = ssub.s32 16, 16
          %435 = vsyncadd [#allocation15], %s434
          %s437 = sshll.u32 [#allocation16], 4
          %s438 = int_to_ptr.vmem [resolvable:$true] %s437
          %440 = dma.hbm_to_vmem [thread:$0]  %s9, 16, %s438, [#allocation15]
        $region36: #{tpu_custom_call.1} parent=11 // pred_fallthru
          _
        // Predicated region
        $region37: #{tpu_custom_call.1} parent=11 // pred_check
          %p441 = pneg %p303
        $region38: #{tpu_custom_call.1} parent=11 // pred_check_branch
          %443 = sbr.rel (%p441) target = $region40
        $region39: #{tpu_custom_call.1} parent=11 // pred_region
          _
        $region40: #{tpu_custom_call.1} parent=11 // pred_fallthru
          _
        // Predicated region
        $region41: #{tpu_custom_call.1} parent=11 // pred_check
          %p444 = pneg %p324
        $region42: #{tpu_custom_call.1} parent=11 // pred_check_branch
          %446 = sbr.rel (%p444) target = $region44
        $region43: #{tpu_custom_call.1} parent=11 // pred_region
          _
        $region44: #{tpu_custom_call.1} parent=11 // pred_fallthru
          _
      $region12: #{tpu_custom_call.1} parent=5 // pred_fallthru
        _
      %p447 = scmp.lt.s32.totalorder %s36, 2
      // Predicated region
      $region45: #{tpu_custom_call.1} parent=5 // pred_check
        %p448 = pneg %p447
      $region46: #{tpu_custom_call.1} parent=5 // pred_check_branch
        %450 = sbr.rel (%p448) target = $region48
      $region47: #{tpu_custom_call.1} parent=5 // pred_region
        // Predicated region
        $region49: #{tpu_custom_call.1} parent=47 // pred_check
          %p451 = pneg %p70
        $region50: #{tpu_custom_call.1} parent=47 // pred_check_branch
          %453 = sbr.rel (%p451) target = $region52
        $region51: #{tpu_custom_call.1} parent=47 // pred_region
          %s454 = sand.u32 %s60, 1
          %s455 = scalar_lea.sflag [#allocation6], %s454
          %s456 = sand.u32 %s60, 1
          %s457 = smul.addr %s456, 8
          %s458 = scalar_lea.vmem [#allocation5], %s457
          %s459 = smul.u32 2, %s43
          %s461 = ssub.s32 128, 128
          %462 = vsyncadd %s455, %s461
          %s463 = sadd.s32 %s44, %s459
          %s464 = smul.addr %s463, 64
          %s465 = scalar_lea.hbm %s0, %s464
          %s466 = sshll.u32 %s458, 4
          %s467 = int_to_ptr.vmem [resolvable:$true] %s466
          %472 = dma.hbm_to_vmem [thread:$0]  %s465, 128, %s467, %s455, 64, 64, 4
        $region52: #{tpu_custom_call.1} parent=47 // pred_fallthru
          _
        // Predicated region
        $region53: #{tpu_custom_call.1} parent=47 // pred_check
          %p473 = pneg %p96
        $region54: #{tpu_custom_call.1} parent=47 // pred_check_branch
          %475 = sbr.rel (%p473) target = $region56
        $region55: #{tpu_custom_call.1} parent=47 // pred_region
          %s476 = sand.u32 %s36, 1
          %s477 = scalar_lea.sflag [#allocation9], %s476
          %s478 = sand.u32 %s86, 1
          %s479 = smul.addr %s478, 8
          %s480 = scalar_lea.vmem [#allocation8], %s479
          %s481 = smul.u32 2, %s43
          %s483 = ssub.s32 128, 128
          %484 = vsyncadd %s477, %s483
          %s485 = smul.addr %s481, 64
          %s486 = scalar_lea.hbm %s1, %s485
          %s487 = sshll.u32 %s480, 4
          %s488 = int_to_ptr.vmem [resolvable:$true] %s487
          %493 = dma.hbm_to_vmem [thread:$0]  %s486, 128, %s488, %s477, 64, 64, 4
        $region56: #{tpu_custom_call.1} parent=47 // pred_fallthru
          _
        // Predicated region
        $region57: #{tpu_custom_call.1} parent=47 // pred_check
          %p494 = pneg %p122
        $region58: #{tpu_custom_call.1} parent=47 // pred_check_branch
          %496 = sbr.rel (%p494) target = $region60
        $region59: #{tpu_custom_call.1} parent=47 // pred_region
          %s497 = sand.u32 %s36, 1
          %s498 = scalar_lea.sflag [#allocation9], %s497
          %s499 = sand.u32 %s112, 1
          %s500 = smul.addr %s499, 8
          %s501 = scalar_lea.vmem [#allocation10], %s500
          %s502 = smul.u32 2, %s43
          %s504 = ssub.s32 128, 128
          %505 = vsyncadd %s498, %s504
          %s506 = smul.addr %s502, 64
          %s507 = scalar_lea.hbm %s2, %s506
          %s508 = sshll.u32 %s501, 4
          %s509 = int_to_ptr.vmem [resolvable:$true] %s508
          %514 = dma.hbm_to_vmem [thread:$0]  %s507, 128, %s509, %s498, 64, 64, 4
        $region60: #{tpu_custom_call.1} parent=47 // pred_fallthru
          _
        // Predicated region
        $region61: #{tpu_custom_call.1} parent=47 // pred_check
          %p515 = pneg %p150
        $region62: #{tpu_custom_call.1} parent=47 // pred_check_branch
          %517 = sbr.rel (%p515) target = $region64
        $region63: #{tpu_custom_call.1} parent=47 // pred_region
          %s518 = sand.u32 %s36, 1
          %s519 = scalar_lea.sflag [#allocation12], %s518
          %s520 = sand.u32 %s140, 1
          %s521 = smul.addr %s520, 4
          %s522 = scalar_lea.vmem [#allocation11], %s521
          %s523 = smul.u32 2, %s43
          %s525 = ssub.s32 64, 64
          %526 = vsyncadd %s519, %s525
          %s527 = sadd.s32 %s44, %s523
          %s528 = smul.addr %s527, 32
          %s529 = scalar_lea.hbm %s3, %s528
          %s530 = sshll.u32 %s522, 4
          %s531 = int_to_ptr.vmem [resolvable:$true] %s530
          %536 = dma.hbm_to_vmem [thread:$0]  %s529, 64, %s531, %s519, 32, 32, 2
        $region64: #{tpu_custom_call.1} parent=47 // pred_fallthru
          _
      $region48: #{tpu_custom_call.1} parent=5 // pred_fallthru
        _
      %p537 = scmp.le.s32.totalorder 1, %s36
      %p538 = scmp.lt.s32.totalorder %s36, 3
      %p539 = pnand %p537, %p538
      %p540 = pneg %p539
      // Predicated region
      $region65: #{tpu_custom_call.1} parent=5 // pred_check
        _
      $region66: #{tpu_custom_call.1} parent=5 // pred_check_branch
        %542 = sbr.rel (%p539) target = $region68
      $region67: #{tpu_custom_call.1} parent=5 // pred_region
        %s543 = ssub.s32 %s36, 1
        %s544 = sand.u32 %s63, 1
        %s545 = scalar_lea.sflag [#allocation6], %s544
        %s546 = sand.u32 %s63, 1
        %s547 = smul.addr %s546, 8
        %s548 = scalar_lea.vmem [#allocation5], %s547
        // Predicated region
        $region69: #{tpu_custom_call.1} parent=67 // pred_check
          %p549 = pneg %p76
        $region70: #{tpu_custom_call.1} parent=67 // pred_check_branch
          %551 = sbr.rel (%p549) target = $region72
        $region71: #{tpu_custom_call.1} parent=67 // pred_region
          %552 = dma.done %s545, 128
        $region72: #{tpu_custom_call.1} parent=67 // pred_fallthru
          _
        %s553 = sand.u32 %s41, 1
        %s554 = scalar_lea.sflag [#allocation9], %s553
        %s555 = sand.u32 %s89, 1
        %s556 = smul.addr %s555, 8
        %s557 = scalar_lea.vmem [#allocation8], %s556
        // Predicated region
        $region73: #{tpu_custom_call.1} parent=67 // pred_check
          %p558 = pneg %p102
        $region74: #{tpu_custom_call.1} parent=67 // pred_check_branch
          %560 = sbr.rel (%p558) target = $region76
        $region75: #{tpu_custom_call.1} parent=67 // pred_region
          %561 = dma.done %s554, 128
        $region76: #{tpu_custom_call.1} parent=67 // pred_fallthru
          _
        %s562 = sand.u32 %s41, 1
        %s563 = scalar_lea.sflag [#allocation9], %s562
        %s564 = sand.u32 %s115, 1
        %s565 = smul.addr %s564, 8
        %s566 = scalar_lea.vmem [#allocation10], %s565
        // Predicated region
        $region77: #{tpu_custom_call.1} parent=67 // pred_check
          %p567 = pneg %p128
        $region78: #{tpu_custom_call.1} parent=67 // pred_check_branch
          %569 = sbr.rel (%p567) target = $region80
        $region79: #{tpu_custom_call.1} parent=67 // pred_region
          %570 = dma.done %s563, 128
        $region80: #{tpu_custom_call.1} parent=67 // pred_fallthru
          _
        %s571 = sand.u32 %s41, 1
        %s572 = scalar_lea.sflag [#allocation12], %s571
        %s573 = sand.u32 %s143, 1
        %s574 = smul.addr %s573, 4
        %s575 = scalar_lea.vmem [#allocation11], %s574
        // Predicated region
        $region81: #{tpu_custom_call.1} parent=67 // pred_check
          %p576 = pneg %p156
        $region82: #{tpu_custom_call.1} parent=67 // pred_check_branch
          %578 = sbr.rel (%p576) target = $region84
        $region83: #{tpu_custom_call.1} parent=67 // pred_region
          %579 = dma.done %s572, 64
        $region84: #{tpu_custom_call.1} parent=67 // pred_fallthru
          _
        // Predicated region
        $region85: #{tpu_custom_call.1} parent=67 // pred_check
          %p580 = pneg %p177
        $region86: #{tpu_custom_call.1} parent=67 // pred_check_branch
          %582 = sbr.rel (%p580) target = $region88
        $region87: #{tpu_custom_call.1} parent=67 // pred_region
          %583 = dma.done [#allocation12], 256
        $region88: #{tpu_custom_call.1} parent=67 // pred_fallthru
          _
        // Predicated region
        $region89: #{tpu_custom_call.1} parent=67 // pred_check
          %p584 = pneg %p261
        $region90: #{tpu_custom_call.1} parent=67 // pred_check_branch
          %586 = sbr.rel (%p584) target = $region92
        $region91: #{tpu_custom_call.1} parent=67 // pred_region
          %587 = dma.done [#allocation15], 256
        $region92: #{tpu_custom_call.1} parent=67 // pred_fallthru
          _
        // Predicated region
        $region93: #{tpu_custom_call.1} parent=67 // pred_check
          %p588 = pneg %p282
        $region94: #{tpu_custom_call.1} parent=67 // pred_check_branch
          %590 = sbr.rel (%p588) target = $region96
        $region95: #{tpu_custom_call.1} parent=67 // pred_region
          %591 = dma.done [#allocation15], 16
        $region96: #{tpu_custom_call.1} parent=67 // pred_fallthru
          _
        %s592 = sand.u32 %s63, 1
        %s593 = scalar_lea.sflag [#allocation6], %s592
        %s594 = sand.u32 %s63, 1
        %s595 = smul.addr %s594, 8
        %s596 = scalar_lea.vmem [#allocation5], %s595
        %p597 = pneg %p76
        %p598 = pneg %p73
        %s599 = sand.u32 %s41, 1
        %s600 = scalar_lea.sflag [#allocation9], %s599
        %s601 = sand.u32 %s89, 1
        %s602 = smul.addr %s601, 8
        %s603 = scalar_lea.vmem [#allocation8], %s602
        %p604 = pneg %p102
        %p605 = pneg %p99
        %s606 = sand.u32 %s41, 1
        %s607 = scalar_lea.sflag [#allocation9], %s606
        %s608 = sand.u32 %s115, 1
        %s609 = smul.addr %s608, 8
        %s610 = scalar_lea.vmem [#allocation10], %s609
        %p611 = pneg %p128
        %p612 = pneg %p125
        %s613 = sand.u32 %s41, 1
        %s614 = scalar_lea.sflag [#allocation12], %s613
        %s615 = sand.u32 %s143, 1
        %s616 = smul.addr %s615, 4
        %s617 = scalar_lea.vmem [#allocation11], %s616
        %p618 = pneg %p156
        %p619 = pneg %p153
        %p620 = pneg %p177
        %p621 = pneg %p174
        %p622 = pneg %p198
        %p623 = pneg %p195
        %p624 = pneg %p219
        %p625 = pneg %p216
        %p626 = pneg %p240
        %p627 = pneg %p237
        %p628 = pneg %p261
        %p629 = pneg %p258
        %p630 = pneg %p282
        %p631 = pneg %p279
        %p632 = pneg %p303
        %p633 = pneg %p300
        %p634 = pneg %p324
        %p635 = pneg %p321
        %p636 = pneg %p352
        %p637 = pneg %p349
        %s638 = sand.u32 %s339, 1
        %s639 = scalar_lea.sflag [#allocation7], %s638
        %s640 = sand.u32 %s339, 1
        %s641 = smul.addr %s640, 16
        %s642 = scalar_lea.vmem [#allocation17], %s641
        %p643 = pneg %p380
        %p644 = pneg %p377
        %s645 = sand.u32 %s367, 1
        %s646 = scalar_lea.sflag [#allocation19], %s645
        %s647 = sand.u32 %s367, 1
        %s648 = smul.addr %s647, 64
        %s649 = scalar_lea.vmem [#allocation18], %s648
        %s650 = smul.u32 2, %s45
        %s651 = smul.u32 2, %s45
        %s652 = smul.u32 2, %s45
        %s653 = smul.u32 2, %s45
        %s654 = smul.u32 2, %s45
        %s655 = smul.u32 2, %s45
        %p657 = scmp.eq.s32.totalorder %s46, 0
        // Predicated region
        $region97: #{tpu_custom_call.1} parent=67 // pred_check
          %p658 = pneg %p657
        $region98: #{tpu_custom_call.1} parent=67 // pred_check_branch
          %660 = sbr.rel (%p658) target = $region100
        $region99: #{tpu_custom_call.1} parent=67 // pred_region
          %v661 = vld [vmem:[%s557] sm:$0xf]
          %v662 = vld [vmem:[%s557 + $0x4] sm:$0xf]
          %v663 = vld [vmem:[%s6] sm:$0xf]
          %v664 = vld [vmem:[%s6 + $0x4] sm:$0xf]
          %v665 = vld [vmem:[%s6 + $0x8] sm:$0xf]
          %v666 = vld [vmem:[%s6 + $0xc] sm:$0xf]
          %v667 = vld [vmem:[%s7] sm:$0x1]
          %v669 = vlaneseq
          %v670 = vshrl.u32 %v669, 7
          %v671 = vsub.s32 0, %v670
          %v672 = vrot.slane %v667, %v671
          %v676 = vunpack.c.l.b16 %v661
          %v677 = vunpack.c.l.b16 %v662
          %v678 = vpack.c.b16 %v677, %v676
          %v683 = vunpack.c.l.b16 %v663
          %v684 = vunpack.c.l.b16 %v664
          %v685 = vunpack.c.l.b16 %v665
          %v686 = vunpack.c.l.b16 %v666
          %v687 = vpack.c.b16 %v684, %v683
          %v688 = vpack.c.b16 %v686, %v685
          %vm691 = vcmask 261120
          %v693 = vsel %vm691, %v678, 0
          %695 = vmatprep.subr.bf16.mxu0 0
          %696 = vmatpush1.bf16.msra.mxu0 %v687
          %697 = vmatprep.subr.bf16.mxu0 0
          %698 = vmatpush1.bf16.msra.mxu0 %v688
          %699 = vmatprep.subr.bf16.mxu0 0
          %700 = vmatpush1.bf16.msra.mxu0 0
          %701 = vmatprep.subr.bf16.mxu0 0
          %702 = vmatpush1.bf16.msra.mxu0 0
          %703 = vmatprep.subr.bf16.mxu0 0
          %704 = vmatpush1.bf16.msra.mxu0 0
          %705 = vmatprep.subr.bf16.mxu0 0
          %706 = vmatpush1.bf16.msra.mxu0 0
          %707 = vmatprep.subr.bf16.mxu0 0
          %708 = vmatpush1.bf16.msra.mxu0 0
          %709 = vmatprep.subr.bf16.mxu0 0
          %710 = vmatpush1.bf16.msra.mxu0 0
          %711 = vmatprep.subr.bf16.mxu0 0
          %712 = vmatpush1.bf16.msra.mxu0 0
          %713 = vmatprep.subr.bf16.mxu0 0
          %714 = vmatpush1.bf16.msra.mxu0 0
          %715 = vmatprep.subr.bf16.mxu0 0
          %716 = vmatpush1.bf16.msra.mxu0 0
          %717 = vmatprep.subr.bf16.mxu0 0
          %718 = vmatpush1.bf16.msra.mxu0 0
          %719 = vmatprep.subr.bf16.mxu0 0
          %720 = vmatpush1.bf16.msra.mxu0 0
          %721 = vmatprep.subr.bf16.mxu0 0
          %722 = vmatpush1.bf16.msra.mxu0 0
          %723 = vmatprep.subr.bf16.mxu0 0
          %724 = vmatpush1.bf16.msra.mxu0 0
          %725 = vmatprep.subr.bf16.mxu0 0
          %726 = vmatpush1.bf16.msra.mxu0 0
          %727 = vmatprep.mubr.bf16.mxu0 0
          %728 = vmatmul.mubr.bf16.gmra.mrb[0].mxu0 %v693
          %v729 = vpop.f32.mrb[0].mxu0
          %v730 = vadd.f32 %v672, %v729
          %v731 = vpop.f32.mrb[0].mxu0
          %v732 = vpop.f32.mrb[0].mxu0
          %v733 = vadd.f32 %v672, %v732
          %v734 = vpop.f32.mrb[0].mxu0
          %735 = vdwg.mxu0
          %v736 = vmax.f32 %v730, 0.0
          %v737 = vmax.f32 %v733, 0.0
          %v738 = vpack.c.bf16 %v737, %v736
          %739 = vst.msk [vmem:[#allocation2] sm:$0xff] %vm691, %v738
          %v740 = vld [vmem:[%s566] sm:$0xf]
          %v741 = vld [vmem:[%s566 + $0x4] sm:$0xf]
          %v742 = vld [vmem:[#allocation14] sm:$0xf]
          %v743 = vld [vmem:[#allocation14 + $0x4] sm:$0xf]
          %v744 = vld [vmem:[#allocation14 + $0x8] sm:$0xf]
          %v745 = vld [vmem:[#allocation14 + $0xc] sm:$0xf]
          %v746 = vld [vmem:[#allocation16] sm:$0x1]
          %v748 = vlaneseq
          %v749 = vshrl.u32 %v748, 7
          %v750 = vsub.s32 0, %v749
          %v751 = vrot.slane %v746, %v750
          %v755 = vunpack.c.l.b16 %v740
          %v756 = vunpack.c.l.b16 %v741
          %v757 = vpack.c.b16 %v756, %v755
          %v762 = vunpack.c.l.b16 %v742
          %v763 = vunpack.c.l.b16 %v743
          %v764 = vunpack.c.l.b16 %v744
          %v765 = vunpack.c.l.b16 %v745
          %v766 = vpack.c.b16 %v763, %v762
          %v767 = vpack.c.b16 %v765, %v764
          %v771 = vsel %vm691, %v757, 0
          %773 = vmatprep.subr.bf16.mxu0 0
          %774 = vmatpush1.bf16.msra.mxu0 %v766
          %775 = vmatprep.subr.bf16.mxu0 0
          %776 = vmatpush1.bf16.msra.mxu0 %v767
          %777 = vmatprep.subr.bf16.mxu0 0
          %778 = vmatpush1.bf16.msra.mxu0 0
          %779 = vmatprep.subr.bf16.mxu0 0
          %780 = vmatpush1.bf16.msra.mxu0 0
          %781 = vmatprep.subr.bf16.mxu0 0
          %782 = vmatpush1.bf16.msra.mxu0 0
          %783 = vmatprep.subr.bf16.mxu0 0
          %784 = vmatpush1.bf16.msra.mxu0 0
          %785 = vmatprep.subr.bf16.mxu0 0
          %786 = vmatpush1.bf16.msra.mxu0 0
          %787 = vmatprep.subr.bf16.mxu0 0
          %788 = vmatpush1.bf16.msra.mxu0 0
          %789 = vmatprep.subr.bf16.mxu0 0
          %790 = vmatpush1.bf16.msra.mxu0 0
          %791 = vmatprep.subr.bf16.mxu0 0
          %792 = vmatpush1.bf16.msra.mxu0 0
          %793 = vmatprep.subr.bf16.mxu0 0
          %794 = vmatpush1.bf16.msra.mxu0 0
          %795 = vmatprep.subr.bf16.mxu0 0
          %796 = vmatpush1.bf16.msra.mxu0 0
          %797 = vmatprep.subr.bf16.mxu0 0
          %798 = vmatpush1.bf16.msra.mxu0 0
          %799 = vmatprep.subr.bf16.mxu0 0
          %800 = vmatpush1.bf16.msra.mxu0 0
          %801 = vmatprep.subr.bf16.mxu0 0
          %802 = vmatpush1.bf16.msra.mxu0 0
          %803 = vmatprep.subr.bf16.mxu0 0
          %804 = vmatpush1.bf16.msra.mxu0 0
          %805 = vmatprep.mubr.bf16.mxu0 0
          %806 = vmatmul.mubr.bf16.gmra.mrb[0].mxu0 %v771
          %v807 = vpop.f32.mrb[0].mxu0
          %v808 = vadd.f32 %v751, %v807
          %v809 = vpop.f32.mrb[0].mxu0
          %v810 = vpop.f32.mrb[0].mxu0
          %v811 = vadd.f32 %v751, %v810
          %v812 = vpop.f32.mrb[0].mxu0
          %813 = vdwg.mxu0
          %v814 = vmax.f32 %v808, 0.0
          %v815 = vmax.f32 %v811, 0.0
          %v816 = vpack.c.bf16 %v815, %v814
          %817 = vst.msk [vmem:[#allocation3] sm:$0xff] %vm691, %v816
        $region100: #{tpu_custom_call.1} parent=67 // pred_fallthru
          _
        %v818 = vld [vmem:[%s548] sm:$0xf]
        %v819 = vld [vmem:[%s548 + $0x4] sm:$0xf]
        %v820 = vld [vmem:[#allocation13] sm:$0xf]
        %v821 = vld [vmem:[#allocation13 + $0x4] sm:$0xf]
        %v822 = vld [vmem:[#allocation13 + $0x8] sm:$0xf]
        %v823 = vld [vmem:[#allocation13 + $0xc] sm:$0xf]
        %v824 = vld [vmem:[%s5] sm:$0x1]
        %v826 = vlaneseq
        %v827 = vshrl.u32 %v826, 7
        %v828 = vsub.s32 0, %v827
        %v829 = vrot.slane %v824, %v828
        %v833 = vunpack.c.l.b16 %v818
        %v834 = vunpack.c.l.b16 %v819
        %v835 = vpack.c.b16 %v834, %v833
        %v840 = vunpack.c.l.b16 %v820
        %v841 = vunpack.c.l.b16 %v821
        %v842 = vunpack.c.l.b16 %v822
        %v843 = vunpack.c.l.b16 %v823
        %v844 = vpack.c.b16 %v841, %v840
        %v845 = vpack.c.b16 %v843, %v842
        %vm848 = vcmask 261120
        %v850 = vsel %vm848, %v835, 0
        %852 = vmatprep.subr.bf16.mxu0 0
        %853 = vmatpush1.bf16.msra.mxu0 %v844
        %854 = vmatprep.subr.bf16.mxu0 0
        %855 = vmatpush1.bf16.msra.mxu0 %v845
        %856 = vmatprep.subr.bf16.mxu0 0
        %857 = vmatpush1.bf16.msra.mxu0 0
        %858 = vmatprep.subr.bf16.mxu0 0
        %859 = vmatpush1.bf16.msra.mxu0 0
        %860 = vmatprep.subr.bf16.mxu0 0
        %861 = vmatpush1.bf16.msra.mxu0 0
        %862 = vmatprep.subr.bf16.mxu0 0
        %863 = vmatpush1.bf16.msra.mxu0 0
        %864 = vmatprep.subr.bf16.mxu0 0
        %865 = vmatpush1.bf16.msra.mxu0 0
        %866 = vmatprep.subr.bf16.mxu0 0
        %867 = vmatpush1.bf16.msra.mxu0 0
        %868 = vmatprep.subr.bf16.mxu0 0
        %869 = vmatpush1.bf16.msra.mxu0 0
        %870 = vmatprep.subr.bf16.mxu0 0
        %871 = vmatpush1.bf16.msra.mxu0 0
        %872 = vmatprep.subr.bf16.mxu0 0
        %873 = vmatpush1.bf16.msra.mxu0 0
        %874 = vmatprep.subr.bf16.mxu0 0
        %875 = vmatpush1.bf16.msra.mxu0 0
        %876 = vmatprep.subr.bf16.mxu0 0
        %877 = vmatpush1.bf16.msra.mxu0 0
        %878 = vmatprep.subr.bf16.mxu0 0
        %879 = vmatpush1.bf16.msra.mxu0 0
        %880 = vmatprep.subr.bf16.mxu0 0
        %881 = vmatpush1.bf16.msra.mxu0 0
        %882 = vmatprep.subr.bf16.mxu0 0
        %883 = vmatpush1.bf16.msra.mxu0 0
        %884 = vmatprep.mubr.bf16.mxu0 0
        %885 = vmatmul.mubr.bf16.gmra.mrb[0].mxu0 %v850
        %v886 = vpop.f32.mrb[0].mxu0
        %v887 = vadd.f32 %v829, %v886
        %v888 = vpop.f32.mrb[0].mxu0
        %v889 = vpop.f32.mrb[0].mxu0
        %v890 = vadd.f32 %v829, %v889
        %v891 = vpop.f32.mrb[0].mxu0
        %892 = vdwg.mxu0
        %v893 = vmax.f32 %v887, 0.0
        %v894 = vmax.f32 %v890, 0.0
        %v895 = vmul.f32 %v893, 0.35355338
        %v896 = vmul.f32 %v894, 0.35355338
        %v897 = vpack.c.bf16 %v896, %v895
        %v899 = vunpack.c.l.b16 %v897
        %v900 = vunpack.c.h.b16 %v897
        %v901 = vpack.c.b16 %v899, %v899
        %v902 = vpack.c.b16 %v900, %v900
        %v903 = vld [vmem:[#allocation2] sm:$0xff]
        %v905 = vunpack.c.l.b16 %v903
        %v906 = vunpack.c.h.b16 %v903
        %v907 = vpack.c.b16 %v905, %v905
        %v908 = vpack.c.b16 %v906, %v906
        %v909 = vld [vmem:[#allocation3] sm:$0xff]
        %v911 = vunpack.c.l.b16 %v909
        %v912 = vunpack.c.h.b16 %v909
        %v913 = vpack.c.b16 %v911, %v911
        %v914 = vpack.c.b16 %v912, %v912
        %v915 = vld [vmem:[%s575] sm:$0x3]
        %v916 = vld [vmem:[%s575 + $0x2] sm:$0x3]
        %v917 = vunpack.c.0.s8 %v915
        %v918 = vunpack.c.0.s8 %v916
        %v919 = vcvt.s32.f32 %v917
        %v920 = vcvt.s32.f32 %v918
        %v921 = vsub.f32 %v919, 1.0
        %v922 = vsub.f32 %v920, 1.0
        %v923 = vmul.f32 %v921, 1e+10
        %v924 = vmul.f32 %v922, 1e+10
        %vm925 = vcmask 64512
        %v927 = vsel %vm925, %v901, 0
        %v930 = vsel %vm925, %v907, 0
        %932 = vmatprep.subr.bf16.mxu0 0
        %933 = vmatpush1.bf16.xpose.msra.mxu0 %v930
        %934 = vmatprep.subr.bf16.mxu0 0
        %935 = vmatpush1.bf16.xpose.msra.mxu0 0
        %936 = vmatprep.subr.bf16.mxu0 0
        %937 = vmatpush1.bf16.xpose.msra.mxu0 0
        %938 = vmatprep.subr.bf16.mxu0 0
        %939 = vmatpush1.bf16.xpose.msra.mxu0 0
        %940 = vmatprep.subr.bf16.mxu0 0
        %941 = vmatpush1.bf16.xpose.msra.mxu0 0
        %942 = vmatprep.subr.bf16.mxu0 0
        %943 = vmatpush1.bf16.xpose.msra.mxu0 0
        %944 = vmatprep.subr.bf16.mxu0 0
        %945 = vmatpush1.bf16.xpose.msra.mxu0 0
        %946 = vmatprep.subr.bf16.mxu0 0
        %947 = vmatpush1.bf16.xpose.msra.mxu0 0
        %948 = vmatprep.subr.bf16.mxu0 0
        %949 = vmatpush1.bf16.xpose.msra.mxu0 0
        %950 = vmatprep.subr.bf16.mxu0 0
        %951 = vmatpush1.bf16.xpose.msra.mxu0 0
        %952 = vmatprep.subr.bf16.mxu0 0
        %953 = vmatpush1.bf16.xpose.msra.mxu0 0
        %954 = vmatprep.subr.bf16.mxu0 0
        %955 = vmatpush1.bf16.xpose.msra.mxu0 0
        %956 = vmatprep.subr.bf16.mxu0 0
        %957 = vmatpush1.bf16.xpose.msra.mxu0 0
        %958 = vmatprep.subr.bf16.mxu0 0
        %959 = vmatpush1.bf16.xpose.msra.mxu0 0
        %960 = vmatprep.subr.bf16.mxu0 0
        %961 = vmatpush1.bf16.xpose.msra.mxu0 0
        %962 = vmatprep.subr.bf16.mxu0 0
        %963 = vmatpush1.bf16.xpose.msra.mxu0 0
        %964 = vmatprep.mubr.bf16.mxu0 0
        %965 = vmatmul.mubr.bf16.gmra.mrb[0].mxu0 %v927
        %v966 = vpop.f32.mrb[0].mxu0
        %v967 = vadd.f32 0.0, %v966
        %v968 = vpop.f32.mrb[0].mxu0
        %v969 = vpop.f32.mrb[0].mxu0
        %v970 = vpop.f32.mrb[0].mxu0
        %971 = vdwg.mxu0
        %v973 = vsel %vm925, %v902, 0
        %v976 = vsel %vm925, %v908, 0
        %978 = vmatprep.subr.bf16.mxu0 0
        %979 = vmatpush1.bf16.xpose.msra.mxu0 %v976
        %980 = vmatprep.subr.bf16.mxu0 0
        %981 = vmatpush1.bf16.xpose.msra.mxu0 0
        %982 = vmatprep.subr.bf16.mxu0 0
        %983 = vmatpush1.bf16.xpose.msra.mxu0 0
        %984 = vmatprep.subr.bf16.mxu0 0
        %985 = vmatpush1.bf16.xpose.msra.mxu0 0
        %986 = vmatprep.subr.bf16.mxu0 0
        %987 = vmatpush1.bf16.xpose.msra.mxu0 0
        %988 = vmatprep.subr.bf16.mxu0 0
        %989 = vmatpush1.bf16.xpose.msra.mxu0 0
        %990 = vmatprep.subr.bf16.mxu0 0
        %991 = vmatpush1.bf16.xpose.msra.mxu0 0
        %992 = vmatprep.subr.bf16.mxu0 0
        %993 = vmatpush1.bf16.xpose.msra.mxu0 0
        %994 = vmatprep.subr.bf16.mxu0 0
        %995 = vmatpush1.bf16.xpose.msra.mxu0 0
        %996 = vmatprep.subr.bf16.mxu0 0
        %997 = vmatpush1.bf16.xpose.msra.mxu0 0
        %998 = vmatprep.subr.bf16.mxu0 0
        %999 = vmatpush1.bf16.xpose.msra.mxu0 0
        %1000 = vmatprep.subr.bf16.mxu0 0
        %1001 = vmatpush1.bf16.xpose.msra.mxu0 0
        %1002 = vmatprep.subr.bf16.mxu0 0
        %1003 = vmatpush1.bf16.xpose.msra.mxu0 0
        %1004 = vmatprep.subr.bf16.mxu0 0
        %1005 = vmatpush1.bf16.xpose.msra.mxu0 0
        %1006 = vmatprep.subr.bf16.mxu0 0
        %1007 = vmatpush1.bf16.xpose.msra.mxu0 0
        %1008 = vmatprep.subr.bf16.mxu0 0
        %1009 = vmatpush1.bf16.xpose.msra.mxu0 0
        %1010 = vmatprep.mubr.bf16.mxu0 0
        %1011 = vmatmul.mubr.bf16.gmra.mrb[0].mxu0 %v973
        %v1012 = vpop.f32.mrb[0].mxu0
        %v1013 = vadd.f32 0.0, %v1012
        %v1014 = vpop.f32.mrb[0].mxu0
        %v1015 = vpop.f32.mrb[0].mxu0
        %v1016 = vpop.f32.mrb[0].mxu0
        %1017 = vdwg.mxu0
        %1018 = vrot.lane.b32.xlu0 %v901, 120
        %v1019 = vpop.permute.xlu0 %1018
        %1020 = vrot.lane.b32.xlu0 %v907, 120
        %v1021 = vpop.permute.xlu0 %1020
        %v1023 = vsel %vm925, %v1019, 0
        %v1026 = vsel %vm925, %v1021, 0
        %1028 = vmatprep.subr.bf16.mxu0 0
        %1029 = vmatpush1.bf16.xpose.msra.mxu0 %v1026
        %1030 = vmatprep.subr.bf16.mxu0 0
        %1031 = vmatpush1.bf16.xpose.msra.mxu0 0
        %1032 = vmatprep.subr.bf16.mxu0 0
        %1033 = vmatpush1.bf16.xpose.msra.mxu0 0
        %1034 = vmatprep.subr.bf16.mxu0 0
        %1035 = vmatpush1.bf16.xpose.msra.mxu0 0
        %1036 = vmatprep.subr.bf16.mxu0 0
        %1037 = vmatpush1.bf16.xpose.msra.mxu0 0
        %1038 = vmatprep.subr.bf16.mxu0 0
        %1039 = vmatpush1.bf16.xpose.msra.mxu0 0
        %1040 = vmatprep.subr.bf16.mxu0 0
        %1041 = vmatpush1.bf16.xpose.msra.mxu0 0
        %1042 = vmatprep.subr.bf16.mxu0 0
        %1043 = vmatpush1.bf16.xpose.msra.mxu0 0
        %1044 = vmatprep.subr.bf16.mxu0 0
        %1045 = vmatpush1.bf16.xpose.msra.mxu0 0
        %1046 = vmatprep.subr.bf16.mxu0 0
        %1047 = vmatpush1.bf16.xpose.msra.mxu0 0
        %1048 = vmatprep.subr.bf16.mxu0 0
        %1049 = vmatpush1.bf16.xpose.msra.mxu0 0
        %1050 = vmatprep.subr.bf16.mxu0 0
        %1051 = vmatpush1.bf16.xpose.msra.mxu0 0
        %1052 = vmatprep.subr.bf16.mxu0 0
        %1053 = vmatpush1.bf16.xpose.msra.mxu0 0
        %1054 = vmatprep.subr.bf16.mxu0 0
        %1055 = vmatpush1.bf16.xpose.msra.mxu0 0
        %1056 = vmatprep.subr.bf16.mxu0 0
        %1057 = vmatpush1.bf16.xpose.msra.mxu0 0
        %1058 = vmatprep.subr.bf16.mxu0 0
        %1059 = vmatpush1.bf16.xpose.msra.mxu0 0
        %1060 = vmatprep.mubr.bf16.mxu0 0
        %1061 = vmatmul.mubr.bf16.gmra.mrb[0].mxu0 %v1023
        %v1062 = vpop.f32.mrb[0].mxu0
        %v1063 = vadd.f32 0.0, %v1062
        %v1064 = vpop.f32.mrb[0].mxu0
        %v1065 = vpop.f32.mrb[0].mxu0
        %v1066 = vpop.f32.mrb[0].mxu0
        %1067 = vdwg.mxu0
        %1068 = vrot.lane.b32.xlu0 %v902, 120
        %v1069 = vpop.permute.xlu0 %1068
        %1070 = vrot.lane.b32.xlu0 %v908, 120
        %v1071 = vpop.permute.xlu0 %1070
        %v1073 = vsel %vm925, %v1069, 0
        %v1076 = vsel %vm925, %v1071, 0
        %1078 = vmatprep.subr.bf16.mxu0 0
        %1079 = vmatpush1.bf16.xpose.msra.mxu0 %v1076
        %1080 = vmatprep.subr.bf16.mxu0 0
        %1081 = vmatpush1.bf16.xpose.msra.mxu0 0
        %1082 = vmatprep.subr.bf16.mxu0 0
        %1083 = vmatpush1.bf16.xpose.msra.mxu0 0
        %1084 = vmatprep.subr.bf16.mxu0 0
        %1085 = vmatpush1.bf16.xpose.msra.mxu0 0
        %1086 = vmatprep.subr.bf16.mxu0 0
        %1087 = vmatpush1.bf16.xpose.msra.mxu0 0
        %1088 = vmatprep.subr.bf16.mxu0 0
        %1089 = vmatpush1.bf16.xpose.msra.mxu0 0
        %1090 = vmatprep.subr.bf16.mxu0 0
        %1091 = vmatpush1.bf16.xpose.msra.mxu0 0
        %1092 = vmatprep.subr.bf16.mxu0 0
        %1093 = vmatpush1.bf16.xpose.msra.mxu0 0
        %1094 = vmatprep.subr.bf16.mxu0 0
        %1095 = vmatpush1.bf16.xpose.msra.mxu0 0
        %1096 = vmatprep.subr.bf16.mxu0 0
        %1097 = vmatpush1.bf16.xpose.msra.mxu0 0
        %1098 = vmatprep.subr.bf16.mxu0 0
        %1099 = vmatpush1.bf16.xpose.msra.mxu0 0
        %1100 = vmatprep.subr.bf16.mxu0 0
        %1101 = vmatpush1.bf16.xpose.msra.mxu0 0
        %1102 = vmatprep.subr.bf16.mxu0 0
        %1103 = vmatpush1.bf16.xpose.msra.mxu0 0
        %1104 = vmatprep.subr.bf16.mxu0 0
        %1105 = vmatpush1.bf16.xpose.msra.mxu0 0
        %1106 = vmatprep.subr.bf16.mxu0 0
        %1107 = vmatpush1.bf16.xpose.msra.mxu0 0
        %1108 = vmatprep.subr.bf16.mxu0 0
        %1109 = vmatpush1.bf16.xpose.msra.mxu0 0
        %1110 = vmatprep.mubr.bf16.mxu0 0
        %1111 = vmatmul.mubr.bf16.gmra.mrb[0].mxu0 %v1073
        %v1112 = vpop.f32.mrb[0].mxu0
        %v1113 = vadd.f32 0.0, %v1112
        %v1114 = vpop.f32.mrb[0].mxu0
        %v1115 = vpop.f32.mrb[0].mxu0
        %v1116 = vpop.f32.mrb[0].mxu0
        %1117 = vdwg.mxu0
        %1118 = vrot.lane.b32.xlu0 %v901, 112
        %v1119 = vpop.permute.xlu0 %1118
        %1120 = vrot.lane.b32.xlu0 %v907, 112
        %v1121 = vpop.permute.xlu0 %1120
        %v1123 = vsel %vm925, %v1119, 0
        %v1126 = vsel %vm925, %v1121, 0
        %1128 = vmatprep.subr.bf16.mxu0 0
        %1129 = vmatpush1.bf16.xpose.msra.mxu0 %v1126
        %1130 = vmatprep.subr.bf16.mxu0 0
        %1131 = vmatpush1.bf16.xpose.msra.mxu0 0
        %1132 = vmatprep.subr.bf16.mxu0 0
        %1133 = vmatpush1.bf16.xpose.msra.mxu0 0
        %1134 = vmatprep.subr.bf16.mxu0 0
        %1135 = vmatpush1.bf16.xpose.msra.mxu0 0
        %1136 = vmatprep.subr.bf16.mxu0 0
        %1137 = vmatpush1.bf16.xpose.msra.mxu0 0
        %1138 = vmatprep.subr.bf16.mxu0 0
        %1139 = vmatpush1.bf16.xpose.msra.mxu0 0
        %1140 = vmatprep.subr.bf16.mxu0 0
        %1141 = vmatpush1.bf16.xpose.msra.mxu0 0
        %1142 = vmatprep.subr.bf16.mxu0 0
        %1143 = vmatpush1.bf16.xpose.msra.mxu0 0
        %1144 = vmatprep.subr.bf16.mxu0 0
        %1145 = vmatpush1.bf16.xpose.msra.mxu0 0
        %1146 = vmatprep.subr.bf16.mxu0 0
        %1147 = vmatpush1.bf16.xpose.msra.mxu0 0
        %1148 = vmatprep.subr.bf16.mxu0 0
        %1149 = vmatpush1.bf16.xpose.msra.mxu0 0
        %1150 = vmatprep.subr.bf16.mxu0 0
        %1151 = vmatpush1.bf16.xpose.msra.mxu0 0
        %1152 = vmatprep.subr.bf16.mxu0 0
        %1153 = vmatpush1.bf16.xpose.msra.mxu0 0
        %1154 = vmatprep.subr.bf16.mxu0 0
        %1155 = vmatpush1.bf16.xpose.msra.mxu0 0
        %1156 = vmatprep.subr.bf16.mxu0 0
        %1157 = vmatpush1.bf16.xpose.msra.mxu0 0
        %1158 = vmatprep.subr.bf16.mxu0 0
        %1159 = vmatpush1.bf16.xpose.msra.mxu0 0
        %1160 = vmatprep.mubr.bf16.mxu0 0
        %1161 = vmatmul.mubr.bf16.gmra.mrb[0].mxu0 %v1123
        %v1162 = vpop.f32.mrb[0].mxu0
        %v1163 = vadd.f32 0.0, %v1162
        %v1164 = vpop.f32.mrb[0].mxu0
        %v1165 = vpop.f32.mrb[0].mxu0
        %v1166 = vpop.f32.mrb[0].mxu0
        %1167 = vdwg.mxu0
        %1168 = vrot.lane.b32.xlu0 %v902, 112
        %v1169 = vpop.permute.xlu0 %1168
        %1170 = vrot.lane.b32.xlu0 %v908, 112
        %v1171 = vpop.permute.xlu0 %1170
        %v1173 = vsel %vm925, %v1169, 0
        %v1176 = vsel %vm925, %v1171, 0
        %1178 = vmatprep.subr.bf16.mxu0 0
        %1179 = vmatpush1.bf16.xpose.msra.mxu0 %v1176
        %1180 = vmatprep.subr.bf16.mxu0 0
        %1181 = vmatpush1.bf16.xpose.msra.mxu0 0
        %1182 = vmatprep.subr.bf16.mxu0 0
        %1183 = vmatpush1.bf16.xpose.msra.mxu0 0
        %1184 = vmatprep.subr.bf16.mxu0 0
        %1185 = vmatpush1.bf16.xpose.msra.mxu0 0
        %1186 = vmatprep.subr.bf16.mxu0 0
        %1187 = vmatpush1.bf16.xpose.msra.mxu0 0
        %1188 = vmatprep.subr.bf16.mxu0 0
        %1189 = vmatpush1.bf16.xpose.msra.mxu0 0
        %1190 = vmatprep.subr.bf16.mxu0 0
        %1191 = vmatpush1.bf16.xpose.msra.mxu0 0
        %1192 = vmatprep.subr.bf16.mxu0 0
        %1193 = vmatpush1.bf16.xpose.msra.mxu0 0
        %1194 = vmatprep.subr.bf16.mxu0 0
        %1195 = vmatpush1.bf16.xpose.msra.mxu0 0
        %1196 = vmatprep.subr.bf16.mxu0 0
        %1197 = vmatpush1.bf16.xpose.msra.mxu0 0
        %1198 = vmatprep.subr.bf16.mxu0 0
        %1199 = vmatpush1.bf16.xpose.msra.mxu0 0
        %1200 = vmatprep.subr.bf16.mxu0 0
        %1201 = vmatpush1.bf16.xpose.msra.mxu0 0
        %1202 = vmatprep.subr.bf16.mxu0 0
        %1203 = vmatpush1.bf16.xpose.msra.mxu0 0
        %1204 = vmatprep.subr.bf16.mxu0 0
        %1205 = vmatpush1.bf16.xpose.msra.mxu0 0
        %1206 = vmatprep.subr.bf16.mxu0 0
        %1207 = vmatpush1.bf16.xpose.msra.mxu0 0
        %1208 = vmatprep.subr.bf16.mxu0 0
        %1209 = vmatpush1.bf16.xpose.msra.mxu0 0
        %1210 = vmatprep.mubr.bf16.mxu0 0
        %1211 = vmatmul.mubr.bf16.gmra.mrb[0].mxu0 %v1173
        %v1212 = vpop.f32.mrb[0].mxu0
        %v1213 = vadd.f32 0.0, %v1212
        %v1214 = vpop.f32.mrb[0].mxu0
        %v1215 = vpop.f32.mrb[0].mxu0
        %v1216 = vpop.f32.mrb[0].mxu0
        %1217 = vdwg.mxu0
        %1218 = vrot.lane.b32.xlu0 %v901, 104
        %v1219 = vpop.permute.xlu0 %1218
        %1220 = vrot.lane.b32.xlu0 %v907, 104
        %v1221 = vpop.permute.xlu0 %1220
        %v1223 = vsel %vm925, %v1219, 0
        %v1226 = vsel %vm925, %v1221, 0
        %1228 = vmatprep.subr.bf16.mxu0 0
        %1229 = vmatpush1.bf16.xpose.msra.mxu0 %v1226
        %1230 = vmatprep.subr.bf16.mxu0 0
        %1231 = vmatpush1.bf16.xpose.msra.mxu0 0
        %1232 = vmatprep.subr.bf16.mxu0 0
        %1233 = vmatpush1.bf16.xpose.msra.mxu0 0
        %1234 = vmatprep.subr.bf16.mxu0 0
        %1235 = vmatpush1.bf16.xpose.msra.mxu0 0
        %1236 = vmatprep.subr.bf16.mxu0 0
        %1237 = vmatpush1.bf16.xpose.msra.mxu0 0
        %1238 = vmatprep.subr.bf16.mxu0 0
        %1239 = vmatpush1.bf16.xpose.msra.mxu0 0
        %1240 = vmatprep.subr.bf16.mxu0 0
        %1241 = vmatpush1.bf16.xpose.msra.mxu0 0
        %1242 = vmatprep.subr.bf16.mxu0 0
        %1243 = vmatpush1.bf16.xpose.msra.mxu0 0
        %1244 = vmatprep.subr.bf16.mxu0 0
        %1245 = vmatpush1.bf16.xpose.msra.mxu0 0
        %1246 = vmatprep.subr.bf16.mxu0 0
        %1247 = vmatpush1.bf16.xpose.msra.mxu0 0
        %1248 = vmatprep.subr.bf16.mxu0 0
        %1249 = vmatpush1.bf16.xpose.msra.mxu0 0
        %1250 = vmatprep.subr.bf16.mxu0 0
        %1251 = vmatpush1.bf16.xpose.msra.mxu0 0
        %1252 = vmatprep.subr.bf16.mxu0 0
        %1253 = vmatpush1.bf16.xpose.msra.mxu0 0
        %1254 = vmatprep.subr.bf16.mxu0 0
        %1255 = vmatpush1.bf16.xpose.msra.mxu0 0
        %1256 = vmatprep.subr.bf16.mxu0 0
        %1257 = vmatpush1.bf16.xpose.msra.mxu0 0
        %1258 = vmatprep.subr.bf16.mxu0 0
        %1259 = vmatpush1.bf16.xpose.msra.mxu0 0
        %1260 = vmatprep.mubr.bf16.mxu0 0
        %1261 = vmatmul.mubr.bf16.gmra.mrb[0].mxu0 %v1223
        %v1262 = vpop.f32.mrb[0].mxu0
        %v1263 = vadd.f32 0.0, %v1262
        %v1264 = vpop.f32.mrb[0].mxu0
        %v1265 = vpop.f32.mrb[0].mxu0
        %v1266 = vpop.f32.mrb[0].mxu0
        %1267 = vdwg.mxu0
        %1268 = vrot.lane.b32.xlu0 %v902, 104
        %v1269 = vpop.permute.xlu0 %1268
        %1270 = vrot.lane.b32.xlu0 %v908, 104
        %v1271 = vpop.permute.xlu0 %1270
        %v1273 = vsel %vm925, %v1269, 0
        %v1276 = vsel %vm925, %v1271, 0
        %1278 = vmatprep.subr.bf16.mxu0 0
        %1279 = vmatpush1.bf16.xpose.msra.mxu0 %v1276
        %1280 = vmatprep.subr.bf16.mxu0 0
        %1281 = vmatpush1.bf16.xpose.msra.mxu0 0
        %1282 = vmatprep.subr.bf16.mxu0 0
        %1283 = vmatpush1.bf16.xpose.msra.mxu0 0
        %1284 = vmatprep.subr.bf16.mxu0 0
        %1285 = vmatpush1.bf16.xpose.msra.mxu0 0
        %1286 = vmatprep.subr.bf16.mxu0 0
        %1287 = vmatpush1.bf16.xpose.msra.mxu0 0
        %1288 = vmatprep.subr.bf16.mxu0 0
        %1289 = vmatpush1.bf16.xpose.msra.mxu0 0
        %1290 = vmatprep.subr.bf16.mxu0 0
        %1291 = vmatpush1.bf16.xpose.msra.mxu0 0
        %1292 = vmatprep.subr.bf16.mxu0 0
        %1293 = vmatpush1.bf16.xpose.msra.mxu0 0
        %1294 = vmatprep.subr.bf16.mxu0 0
        %1295 = vmatpush1.bf16.xpose.msra.mxu0 0
        %1296 = vmatprep.subr.bf16.mxu0 0
        %1297 = vmatpush1.bf16.xpose.msra.mxu0 0
        %1298 = vmatprep.subr.bf16.mxu0 0
        %1299 = vmatpush1.bf16.xpose.msra.mxu0 0
        %1300 = vmatprep.subr.bf16.mxu0 0
        %1301 = vmatpush1.bf16.xpose.msra.mxu0 0
        %1302 = vmatprep.subr.bf16.mxu0 0
        %1303 = vmatpush1.bf16.xpose.msra.mxu0 0
        %1304 = vmatprep.subr.bf16.mxu0 0
        %1305 = vmatpush1.bf16.xpose.msra.mxu0 0
        %1306 = vmatprep.subr.bf16.mxu0 0
        %1307 = vmatpush1.bf16.xpose.msra.mxu0 0
        %1308 = vmatprep.subr.bf16.mxu0 0
        %1309 = vmatpush1.bf16.xpose.msra.mxu0 0
        %1310 = vmatprep.mubr.bf16.mxu0 0
        %1311 = vmatmul.mubr.bf16.gmra.mrb[0].mxu0 %v1273
        %v1312 = vpop.f32.mrb[0].mxu0
        %v1313 = vadd.f32 0.0, %v1312
        %v1314 = vpop.f32.mrb[0].mxu0
        %v1315 = vpop.f32.mrb[0].mxu0
        %v1316 = vpop.f32.mrb[0].mxu0
        %1317 = vdwg.mxu0
        %v1318 = vadd.f32 %v967, %v923
        %v1319 = vadd.f32 %v1063, %v923
        %v1320 = vadd.f32 %v1163, %v923
        %v1321 = vadd.f32 %v1263, %v923
        %v1322 = vadd.f32 %v1013, %v924
        %v1323 = vadd.f32 %v1113, %v924
        %v1324 = vadd.f32 %v1213, %v924
        %v1325 = vadd.f32 %v1313, %v924
        %v1326 = vsel %vm925, %v1318, -inf
        %1327 = vmax.xlane.f32.xlu0 %v1326
        %v1328 = vpop.xlane.xlu0 %1327
        %v1329 = vsel %vm925, %v1319, -inf
        %1330 = vmax.xlane.f32.xlu0 %v1329
        %v1331 = vpop.xlane.xlu0 %1330
        %v1332 = vsel %vm925, %v1320, -inf
        %1333 = vmax.xlane.f32.xlu0 %v1332
        %v1334 = vpop.xlane.xlu0 %1333
        %v1335 = vsel %vm925, %v1321, -inf
        %1336 = vmax.xlane.f32.xlu0 %v1335
        %v1337 = vpop.xlane.xlu0 %1336
        %v1338 = vsel %vm925, %v1322, -inf
        %1339 = vmax.xlane.f32.xlu0 %v1338
        %v1340 = vpop.xlane.xlu0 %1339
        %v1341 = vsel %vm925, %v1323, -inf
        %1342 = vmax.xlane.f32.xlu0 %v1341
        %v1343 = vpop.xlane.xlu0 %1342
        %v1344 = vsel %vm925, %v1324, -inf
        %1345 = vmax.xlane.f32.xlu0 %v1344
        %v1346 = vpop.xlane.xlu0 %1345
        %v1347 = vsel %vm925, %v1325, -inf
        %1348 = vmax.xlane.f32.xlu0 %v1347
        %v1349 = vpop.xlane.xlu0 %1348
        %v1350 = vsub.f32 %v1318, %v1328
        %v1351 = vsub.f32 %v1319, %v1331
        %v1352 = vsub.f32 %v1320, %v1334
        %v1353 = vsub.f32 %v1321, %v1337
        %v1354 = vsub.f32 %v1322, %v1340
        %v1355 = vsub.f32 %v1323, %v1343
        %v1356 = vsub.f32 %v1324, %v1346
        %v1357 = vsub.f32 %v1325, %v1349
        %v1358 = vmul.f32 %v1350, 1.442695
        %v1359 = vpow.pop %v1358
        %v1360 = vmul.f32 %v1351, 1.442695
        %v1361 = vpow.pop %v1360
        %v1362 = vmul.f32 %v1352, 1.442695
        %v1363 = vpow.pop %v1362
        %v1364 = vmul.f32 %v1353, 1.442695
        %v1365 = vpow.pop %v1364
        %v1366 = vmul.f32 %v1354, 1.442695
        %v1367 = vpow.pop %v1366
        %v1368 = vmul.f32 %v1355, 1.442695
        %v1369 = vpow.pop %v1368
        %v1370 = vmul.f32 %v1356, 1.442695
        %v1371 = vpow.pop %v1370
        %v1372 = vmul.f32 %v1357, 1.442695
        %v1373 = vpow.pop %v1372
        %v1374 = vsel %vm925, %v1359, 0.0
        %1375 = vadd.xlane.f32.xlu0 %v1374
        %v1376 = vpop.xlane.xlu0 %1375
        %v1377 = vsel %vm925, %v1361, 0.0
        %1378 = vadd.xlane.f32.xlu0 %v1377
        %v1379 = vpop.xlane.xlu0 %1378
        %v1380 = vsel %vm925, %v1363, 0.0
        %1381 = vadd.xlane.f32.xlu0 %v1380
        %v1382 = vpop.xlane.xlu0 %1381
        %v1383 = vsel %vm925, %v1365, 0.0
        %1384 = vadd.xlane.f32.xlu0 %v1383
        %v1385 = vpop.xlane.xlu0 %1384
        %v1386 = vsel %vm925, %v1367, 0.0
        %1387 = vadd.xlane.f32.xlu0 %v1386
        %v1388 = vpop.xlane.xlu0 %1387
        %v1389 = vsel %vm925, %v1369, 0.0
        %1390 = vadd.xlane.f32.xlu0 %v1389
        %v1391 = vpop.xlane.xlu0 %1390
        %v1392 = vsel %vm925, %v1371, 0.0
        %1393 = vadd.xlane.f32.xlu0 %v1392
        %v1394 = vpop.xlane.xlu0 %1393
        %v1395 = vsel %vm925, %v1373, 0.0
        %1396 = vadd.xlane.f32.xlu0 %v1395
        %v1397 = vpop.xlane.xlu0 %1396
        %v1398 = vrcp.pop %v1376
        %v1399 = vmul.f32 1.0, %v1398
        %v1400 = vrcp.pop %v1379
        %v1401 = vmul.f32 1.0, %v1400
        %v1402 = vrcp.pop %v1382
        %v1403 = vmul.f32 1.0, %v1402
        %v1404 = vrcp.pop %v1385
        %v1405 = vmul.f32 1.0, %v1404
        %v1406 = vrcp.pop %v1388
        %v1407 = vmul.f32 1.0, %v1406
        %v1408 = vrcp.pop %v1391
        %v1409 = vmul.f32 1.0, %v1408
        %v1410 = vrcp.pop %v1394
        %v1411 = vmul.f32 1.0, %v1410
        %v1412 = vrcp.pop %v1397
        %v1413 = vmul.f32 1.0, %v1412
        %v1414 = vmul.f32 %v1359, %v1399
        %v1415 = vmul.f32 %v1361, %v1401
        %v1416 = vmul.f32 %v1363, %v1403
        %v1417 = vmul.f32 %v1365, %v1405
        %v1418 = vmul.f32 %v1367, %v1407
        %v1419 = vmul.f32 %v1369, %v1409
        %v1420 = vmul.f32 %v1371, %v1411
        %v1421 = vmul.f32 %v1373, %v1413
        %1422 = vst.msk [vmem:[%s649] sm:$0xff] %vm925, %v1414
        %1423 = vst.msk [vmem:[%s649 + $0x8] sm:$0xff] %vm925, %v1415
        %1424 = vst.msk [vmem:[%s649 + $0x10] sm:$0xff] %vm925, %v1416
        %1425 = vst.msk [vmem:[%s649 + $0x18] sm:$0xff] %vm925, %v1417
        %1426 = vst.msk [vmem:[%s649 + $0x20] sm:$0xff] %vm925, %v1418
        %1427 = vst.msk [vmem:[%s649 + $0x28] sm:$0xff] %vm925, %v1419
        %1428 = vst.msk [vmem:[%s649 + $0x30] sm:$0xff] %vm925, %v1420
        %1429 = vst.msk [vmem:[%s649 + $0x38] sm:$0xff] %vm925, %v1421
        %v1430 = vpack.c.bf16 %v1414, %v1414
        %v1431 = vpack.c.bf16 %v1415, %v1415
        %v1432 = vpack.c.bf16 %v1416, %v1416
        %v1433 = vpack.c.bf16 %v1417, %v1417
        %v1434 = vpack.c.bf16 %v1418, %v1418
        %v1435 = vpack.c.bf16 %v1419, %v1419
        %v1436 = vpack.c.bf16 %v1420, %v1420
        %v1437 = vpack.c.bf16 %v1421, %v1421
        %v1439 = vsel %vm925, %v1430, 0
        %vm1441 = vcmask 1043456
        %v1443 = vsel %vm1441, %v913, 0
        %1445 = vmatprep.subr.bf16.mxu0 0
        %1446 = vmatpush1.bf16.msra.mxu0 %v1443
        %1447 = vmatprep.subr.bf16.mxu0 0
        %1448 = vmatpush1.bf16.msra.mxu0 0
        %1449 = vmatprep.subr.bf16.mxu0 0
        %1450 = vmatpush1.bf16.msra.mxu0 0
        %1451 = vmatprep.subr.bf16.mxu0 0
        %1452 = vmatpush1.bf16.msra.mxu0 0
        %1453 = vmatprep.subr.bf16.mxu0 0
        %1454 = vmatpush1.bf16.msra.mxu0 0
        %1455 = vmatprep.subr.bf16.mxu0 0
        %1456 = vmatpush1.bf16.msra.mxu0 0
        %1457 = vmatprep.subr.bf16.mxu0 0
        %1458 = vmatpush1.bf16.msra.mxu0 0
        %1459 = vmatprep.subr.bf16.mxu0 0
        %1460 = vmatpush1.bf16.msra.mxu0 0
        %1461 = vmatprep.subr.bf16.mxu0 0
        %1462 = vmatpush1.bf16.msra.mxu0 0
        %1463 = vmatprep.subr.bf16.mxu0 0
        %1464 = vmatpush1.bf16.msra.mxu0 0
        %1465 = vmatprep.subr.bf16.mxu0 0
        %1466 = vmatpush1.bf16.msra.mxu0 0
        %1467 = vmatprep.subr.bf16.mxu0 0
        %1468 = vmatpush1.bf16.msra.mxu0 0
        %1469 = vmatprep.subr.bf16.mxu0 0
        %1470 = vmatpush1.bf16.msra.mxu0 0
        %1471 = vmatprep.subr.bf16.mxu0 0
        %1472 = vmatpush1.bf16.msra.mxu0 0
        %1473 = vmatprep.subr.bf16.mxu0 0
        %1474 = vmatpush1.bf16.msra.mxu0 0
        %1475 = vmatprep.subr.bf16.mxu0 0
        %1476 = vmatpush1.bf16.msra.mxu0 0
        %1477 = vmatprep.mubr.bf16.mxu0 0
        %1478 = vmatmul.mubr.bf16.gmra.mrb[0].mxu0 %v1439
        %v1479 = vpop.f32.mrb[0].mxu0
        %v1480 = vadd.f32 0.0, %v1479
        %v1481 = vpop.f32.mrb[0].mxu0
        %v1482 = vpop.f32.mrb[0].mxu0
        %v1483 = vpop.f32.mrb[0].mxu0
        %1484 = vdwg.mxu0
        %v1486 = vsel %vm925, %v1434, 0
        %v1489 = vsel %vm1441, %v914, 0
        %1491 = vmatprep.subr.bf16.mxu0 0
        %1492 = vmatpush1.bf16.msra.mxu0 %v1489
        %1493 = vmatprep.subr.bf16.mxu0 0
        %1494 = vmatpush1.bf16.msra.mxu0 0
        %1495 = vmatprep.subr.bf16.mxu0 0
        %1496 = vmatpush1.bf16.msra.mxu0 0
        %1497 = vmatprep.subr.bf16.mxu0 0
        %1498 = vmatpush1.bf16.msra.mxu0 0
        %1499 = vmatprep.subr.bf16.mxu0 0
        %1500 = vmatpush1.bf16.msra.mxu0 0
        %1501 = vmatprep.subr.bf16.mxu0 0
        %1502 = vmatpush1.bf16.msra.mxu0 0
        %1503 = vmatprep.subr.bf16.mxu0 0
        %1504 = vmatpush1.bf16.msra.mxu0 0
        %1505 = vmatprep.subr.bf16.mxu0 0
        %1506 = vmatpush1.bf16.msra.mxu0 0
        %1507 = vmatprep.subr.bf16.mxu0 0
        %1508 = vmatpush1.bf16.msra.mxu0 0
        %1509 = vmatprep.subr.bf16.mxu0 0
        %1510 = vmatpush1.bf16.msra.mxu0 0
        %1511 = vmatprep.subr.bf16.mxu0 0
        %1512 = vmatpush1.bf16.msra.mxu0 0
        %1513 = vmatprep.subr.bf16.mxu0 0
        %1514 = vmatpush1.bf16.msra.mxu0 0
        %1515 = vmatprep.subr.bf16.mxu0 0
        %1516 = vmatpush1.bf16.msra.mxu0 0
        %1517 = vmatprep.subr.bf16.mxu0 0
        %1518 = vmatpush1.bf16.msra.mxu0 0
        %1519 = vmatprep.subr.bf16.mxu0 0
        %1520 = vmatpush1.bf16.msra.mxu0 0
        %1521 = vmatprep.subr.bf16.mxu0 0
        %1522 = vmatpush1.bf16.msra.mxu0 0
        %1523 = vmatprep.mubr.bf16.mxu0 0
        %1524 = vmatmul.mubr.bf16.gmra.mrb[0].mxu0 %v1486
        %v1525 = vpop.f32.mrb[0].mxu0
        %v1526 = vadd.f32 0.0, %v1525
        %v1527 = vpop.f32.mrb[0].mxu0
        %v1528 = vpop.f32.mrb[0].mxu0
        %v1529 = vpop.f32.mrb[0].mxu0
        %1530 = vdwg.mxu0
        %v1531 = vpack.c.bf16 %v1526, %v1480
        %1532 = vst.msk [vmem:[#allocation4] sm:$0xff] %vm925, %v1531
        %1533 = vrot.lane.b32.xlu0 %v913, 120
        %v1534 = vpop.permute.xlu0 %1533
        %v1536 = vsel %vm925, %v1431, 0
        %v1539 = vsel %vm1441, %v1534, 0
        %1541 = vmatprep.subr.bf16.mxu0 0
        %1542 = vmatpush1.bf16.msra.mxu0 %v1539
        %1543 = vmatprep.subr.bf16.mxu0 0
        %1544 = vmatpush1.bf16.msra.mxu0 0
        %1545 = vmatprep.subr.bf16.mxu0 0
        %1546 = vmatpush1.bf16.msra.mxu0 0
        %1547 = vmatprep.subr.bf16.mxu0 0
        %1548 = vmatpush1.bf16.msra.mxu0 0
        %1549 = vmatprep.subr.bf16.mxu0 0
        %1550 = vmatpush1.bf16.msra.mxu0 0
        %1551 = vmatprep.subr.bf16.mxu0 0
        %1552 = vmatpush1.bf16.msra.mxu0 0
        %1553 = vmatprep.subr.bf16.mxu0 0
        %1554 = vmatpush1.bf16.msra.mxu0 0
        %1555 = vmatprep.subr.bf16.mxu0 0
        %1556 = vmatpush1.bf16.msra.mxu0 0
        %1557 = vmatprep.subr.bf16.mxu0 0
        %1558 = vmatpush1.bf16.msra.mxu0 0
        %1559 = vmatprep.subr.bf16.mxu0 0
        %1560 = vmatpush1.bf16.msra.mxu0 0
        %1561 = vmatprep.subr.bf16.mxu0 0
        %1562 = vmatpush1.bf16.msra.mxu0 0
        %1563 = vmatprep.subr.bf16.mxu0 0
        %1564 = vmatpush1.bf16.msra.mxu0 0
        %1565 = vmatprep.subr.bf16.mxu0 0
        %1566 = vmatpush1.bf16.msra.mxu0 0
        %1567 = vmatprep.subr.bf16.mxu0 0
        %1568 = vmatpush1.bf16.msra.mxu0 0
        %1569 = vmatprep.subr.bf16.mxu0 0
        %1570 = vmatpush1.bf16.msra.mxu0 0
        %1571 = vmatprep.subr.bf16.mxu0 0
        %1572 = vmatpush1.bf16.msra.mxu0 0
        %1573 = vmatprep.mubr.bf16.mxu0 0
        %1574 = vmatmul.mubr.bf16.gmra.mrb[0].mxu0 %v1536
        %v1575 = vpop.f32.mrb[0].mxu0
        %v1576 = vadd.f32 0.0, %v1575
        %v1577 = vpop.f32.mrb[0].mxu0
        %v1578 = vpop.f32.mrb[0].mxu0
        %v1579 = vpop.f32.mrb[0].mxu0
        %1580 = vdwg.mxu0
        %1581 = vrot.lane.b32.xlu0 %v914, 120
        %v1582 = vpop.permute.xlu0 %1581
        %v1584 = vsel %vm925, %v1435, 0
        %v1587 = vsel %vm1441, %v1582, 0
        %1589 = vmatprep.subr.bf16.mxu0 0
        %1590 = vmatpush1.bf16.msra.mxu0 %v1587
        %1591 = vmatprep.subr.bf16.mxu0 0
        %1592 = vmatpush1.bf16.msra.mxu0 0
        %1593 = vmatprep.subr.bf16.mxu0 0
        %1594 = vmatpush1.bf16.msra.mxu0 0
        %1595 = vmatprep.subr.bf16.mxu0 0
        %1596 = vmatpush1.bf16.msra.mxu0 0
        %1597 = vmatprep.subr.bf16.mxu0 0
        %1598 = vmatpush1.bf16.msra.mxu0 0
        %1599 = vmatprep.subr.bf16.mxu0 0
        %1600 = vmatpush1.bf16.msra.mxu0 0
        %1601 = vmatprep.subr.bf16.mxu0 0
        %1602 = vmatpush1.bf16.msra.mxu0 0
        %1603 = vmatprep.subr.bf16.mxu0 0
        %1604 = vmatpush1.bf16.msra.mxu0 0
        %1605 = vmatprep.subr.bf16.mxu0 0
        %1606 = vmatpush1.bf16.msra.mxu0 0
        %1607 = vmatprep.subr.bf16.mxu0 0
        %1608 = vmatpush1.bf16.msra.mxu0 0
        %1609 = vmatprep.subr.bf16.mxu0 0
        %1610 = vmatpush1.bf16.msra.mxu0 0
        %1611 = vmatprep.subr.bf16.mxu0 0
        %1612 = vmatpush1.bf16.msra.mxu0 0
        %1613 = vmatprep.subr.bf16.mxu0 0
        %1614 = vmatpush1.bf16.msra.mxu0 0
        %1615 = vmatprep.subr.bf16.mxu0 0
        %1616 = vmatpush1.bf16.msra.mxu0 0
        %1617 = vmatprep.subr.bf16.mxu0 0
        %1618 = vmatpush1.bf16.msra.mxu0 0
        %1619 = vmatprep.subr.bf16.mxu0 0
        %1620 = vmatpush1.bf16.msra.mxu0 0
        %1621 = vmatprep.mubr.bf16.mxu0 0
        %1622 = vmatmul.mubr.bf16.gmra.mrb[0].mxu0 %v1584
        %v1623 = vpop.f32.mrb[0].mxu0
        %v1624 = vadd.f32 0.0, %v1623
        %v1625 = vpop.f32.mrb[0].mxu0
        %v1626 = vpop.f32.mrb[0].mxu0
        %v1627 = vpop.f32.mrb[0].mxu0
        %1628 = vdwg.mxu0
        %v1629 = vpack.c.bf16 %v1624, %v1576
        %1631 = vrot.lane.b32.xlu0 %v1629, 8
        %v1632 = vpop.permute.xlu0 %1631
        %vm1634 = vcmask 130112
        %1635 = vst.msk [vmem:[#allocation4] sm:$0xff] %vm1634, %v1632
        %1636 = vrot.lane.b32.xlu0 %v913, 112
        %v1637 = vpop.permute.xlu0 %1636
        %v1639 = vsel %vm925, %v1432, 0
        %v1642 = vsel %vm1441, %v1637, 0
        %1644 = vmatprep.subr.bf16.mxu0 0
        %1645 = vmatpush1.bf16.msra.mxu0 %v1642
        %1646 = vmatprep.subr.bf16.mxu0 0
        %1647 = vmatpush1.bf16.msra.mxu0 0
        %1648 = vmatprep.subr.bf16.mxu0 0
        %1649 = vmatpush1.bf16.msra.mxu0 0
        %1650 = vmatprep.subr.bf16.mxu0 0
        %1651 = vmatpush1.bf16.msra.mxu0 0
        %1652 = vmatprep.subr.bf16.mxu0 0
        %1653 = vmatpush1.bf16.msra.mxu0 0
        %1654 = vmatprep.subr.bf16.mxu0 0
        %1655 = vmatpush1.bf16.msra.mxu0 0
        %1656 = vmatprep.subr.bf16.mxu0 0
        %1657 = vmatpush1.bf16.msra.mxu0 0
        %1658 = vmatprep.subr.bf16.mxu0 0
        %1659 = vmatpush1.bf16.msra.mxu0 0
        %1660 = vmatprep.subr.bf16.mxu0 0
        %1661 = vmatpush1.bf16.msra.mxu0 0
        %1662 = vmatprep.subr.bf16.mxu0 0
        %1663 = vmatpush1.bf16.msra.mxu0 0
        %1664 = vmatprep.subr.bf16.mxu0 0
        %1665 = vmatpush1.bf16.msra.mxu0 0
        %1666 = vmatprep.subr.bf16.mxu0 0
        %1667 = vmatpush1.bf16.msra.mxu0 0
        %1668 = vmatprep.subr.bf16.mxu0 0
        %1669 = vmatpush1.bf16.msra.mxu0 0
        %1670 = vmatprep.subr.bf16.mxu0 0
        %1671 = vmatpush1.bf16.msra.mxu0 0
        %1672 = vmatprep.subr.bf16.mxu0 0
        %1673 = vmatpush1.bf16.msra.mxu0 0
        %1674 = vmatprep.subr.bf16.mxu0 0
        %1675 = vmatpush1.bf16.msra.mxu0 0
        %1676 = vmatprep.mubr.bf16.mxu0 0
        %1677 = vmatmul.mubr.bf16.gmra.mrb[0].mxu0 %v1639
        %v1678 = vpop.f32.mrb[0].mxu0
        %v1679 = vadd.f32 0.0, %v1678
        %v1680 = vpop.f32.mrb[0].mxu0
        %v1681 = vpop.f32.mrb[0].mxu0
        %v1682 = vpop.f32.mrb[0].mxu0
        %1683 = vdwg.mxu0
        %1684 = vrot.lane.b32.xlu0 %v914, 112
        %v1685 = vpop.permute.xlu0 %1684
        %v1687 = vsel %vm925, %v1436, 0
        %v1690 = vsel %vm1441, %v1685, 0
        %1692 = vmatprep.subr.bf16.mxu0 0
        %1693 = vmatpush1.bf16.msra.mxu0 %v1690
        %1694 = vmatprep.subr.bf16.mxu0 0
        %1695 = vmatpush1.bf16.msra.mxu0 0
        %1696 = vmatprep.subr.bf16.mxu0 0
        %1697 = vmatpush1.bf16.msra.mxu0 0
        %1698 = vmatprep.subr.bf16.mxu0 0
        %1699 = vmatpush1.bf16.msra.mxu0 0
        %1700 = vmatprep.subr.bf16.mxu0 0
        %1701 = vmatpush1.bf16.msra.mxu0 0
        %1702 = vmatprep.subr.bf16.mxu0 0
        %1703 = vmatpush1.bf16.msra.mxu0 0
        %1704 = vmatprep.subr.bf16.mxu0 0
        %1705 = vmatpush1.bf16.msra.mxu0 0
        %1706 = vmatprep.subr.bf16.mxu0 0
        %1707 = vmatpush1.bf16.msra.mxu0 0
        %1708 = vmatprep.subr.bf16.mxu0 0
        %1709 = vmatpush1.bf16.msra.mxu0 0
        %1710 = vmatprep.subr.bf16.mxu0 0
        %1711 = vmatpush1.bf16.msra.mxu0 0
        %1712 = vmatprep.subr.bf16.mxu0 0
        %1713 = vmatpush1.bf16.msra.mxu0 0
        %1714 = vmatprep.subr.bf16.mxu0 0
        %1715 = vmatpush1.bf16.msra.mxu0 0
        %1716 = vmatprep.subr.bf16.mxu0 0
        %1717 = vmatpush1.bf16.msra.mxu0 0
        %1718 = vmatprep.subr.bf16.mxu0 0
        %1719 = vmatpush1.bf16.msra.mxu0 0
        %1720 = vmatprep.subr.bf16.mxu0 0
        %1721 = vmatpush1.bf16.msra.mxu0 0
        %1722 = vmatprep.subr.bf16.mxu0 0
        %1723 = vmatpush1.bf16.msra.mxu0 0
        %1724 = vmatprep.mubr.bf16.mxu0 0
        %1725 = vmatmul.mubr.bf16.gmra.mrb[0].mxu0 %v1687
        %v1726 = vpop.f32.mrb[0].mxu0
        %v1727 = vadd.f32 0.0, %v1726
        %v1728 = vpop.f32.mrb[0].mxu0
        %v1729 = vpop.f32.mrb[0].mxu0
        %v1730 = vpop.f32.mrb[0].mxu0
        %1731 = vdwg.mxu0
        %v1732 = vpack.c.bf16 %v1727, %v1679
        %1734 = vrot.lane.b32.xlu0 %v1732, 16
        %v1735 = vpop.permute.xlu0 %1734
        %vm1737 = vcmask 195712
        %1738 = vst.msk [vmem:[#allocation4] sm:$0xff] %vm1737, %v1735
        %1739 = vrot.lane.b32.xlu0 %v913, 104
        %v1740 = vpop.permute.xlu0 %1739
        %v1742 = vsel %vm925, %v1433, 0
        %v1745 = vsel %vm1441, %v1740, 0
        %1747 = vmatprep.subr.bf16.mxu0 0
        %1748 = vmatpush1.bf16.msra.mxu0 %v1745
        %1749 = vmatprep.subr.bf16.mxu0 0
        %1750 = vmatpush1.bf16.msra.mxu0 0
        %1751 = vmatprep.subr.bf16.mxu0 0
        %1752 = vmatpush1.bf16.msra.mxu0 0
        %1753 = vmatprep.subr.bf16.mxu0 0
        %1754 = vmatpush1.bf16.msra.mxu0 0
        %1755 = vmatprep.subr.bf16.mxu0 0
        %1756 = vmatpush1.bf16.msra.mxu0 0
        %1757 = vmatprep.subr.bf16.mxu0 0
        %1758 = vmatpush1.bf16.msra.mxu0 0
        %1759 = vmatprep.subr.bf16.mxu0 0
        %1760 = vmatpush1.bf16.msra.mxu0 0
        %1761 = vmatprep.subr.bf16.mxu0 0
        %1762 = vmatpush1.bf16.msra.mxu0 0
        %1763 = vmatprep.subr.bf16.mxu0 0
        %1764 = vmatpush1.bf16.msra.mxu0 0
        %1765 = vmatprep.subr.bf16.mxu0 0
        %1766 = vmatpush1.bf16.msra.mxu0 0
        %1767 = vmatprep.subr.bf16.mxu0 0
        %1768 = vmatpush1.bf16.msra.mxu0 0
        %1769 = vmatprep.subr.bf16.mxu0 0
        %1770 = vmatpush1.bf16.msra.mxu0 0
        %1771 = vmatprep.subr.bf16.mxu0 0
        %1772 = vmatpush1.bf16.msra.mxu0 0
        %1773 = vmatprep.subr.bf16.mxu0 0
        %1774 = vmatpush1.bf16.msra.mxu0 0
        %1775 = vmatprep.subr.bf16.mxu0 0
        %1776 = vmatpush1.bf16.msra.mxu0 0
        %1777 = vmatprep.subr.bf16.mxu0 0
        %1778 = vmatpush1.bf16.msra.mxu0 0
        %1779 = vmatprep.mubr.bf16.mxu0 0
        %1780 = vmatmul.mubr.bf16.gmra.mrb[0].mxu0 %v1742
        %v1781 = vpop.f32.mrb[0].mxu0
        %v1782 = vadd.f32 0.0, %v1781
        %v1783 = vpop.f32.mrb[0].mxu0
        %v1784 = vpop.f32.mrb[0].mxu0
        %v1785 = vpop.f32.mrb[0].mxu0
        %1786 = vdwg.mxu0
        %1787 = vrot.lane.b32.xlu0 %v914, 104
        %v1788 = vpop.permute.xlu0 %1787
        %v1790 = vsel %vm925, %v1437, 0
        %v1793 = vsel %vm1441, %v1788, 0
        %1795 = vmatprep.subr.bf16.mxu0 0
        %1796 = vmatpush1.bf16.msra.mxu0 %v1793
        %1797 = vmatprep.subr.bf16.mxu0 0
        %1798 = vmatpush1.bf16.msra.mxu0 0
        %1799 = vmatprep.subr.bf16.mxu0 0
        %1800 = vmatpush1.bf16.msra.mxu0 0
        %1801 = vmatprep.subr.bf16.mxu0 0
        %1802 = vmatpush1.bf16.msra.mxu0 0
        %1803 = vmatprep.subr.bf16.mxu0 0
        %1804 = vmatpush1.bf16.msra.mxu0 0
        %1805 = vmatprep.subr.bf16.mxu0 0
        %1806 = vmatpush1.bf16.msra.mxu0 0
        %1807 = vmatprep.subr.bf16.mxu0 0
        %1808 = vmatpush1.bf16.msra.mxu0 0
        %1809 = vmatprep.subr.bf16.mxu0 0
        %1810 = vmatpush1.bf16.msra.mxu0 0
        %1811 = vmatprep.subr.bf16.mxu0 0
        %1812 = vmatpush1.bf16.msra.mxu0 0
        %1813 = vmatprep.subr.bf16.mxu0 0
        %1814 = vmatpush1.bf16.msra.mxu0 0
        %1815 = vmatprep.subr.bf16.mxu0 0
        %1816 = vmatpush1.bf16.msra.mxu0 0
        %1817 = vmatprep.subr.bf16.mxu0 0
        %1818 = vmatpush1.bf16.msra.mxu0 0
        %1819 = vmatprep.subr.bf16.mxu0 0
        %1820 = vmatpush1.bf16.msra.mxu0 0
        %1821 = vmatprep.subr.bf16.mxu0 0
        %1822 = vmatpush1.bf16.msra.mxu0 0
        %1823 = vmatprep.subr.bf16.mxu0 0
        %1824 = vmatpush1.bf16.msra.mxu0 0
        %1825 = vmatprep.subr.bf16.mxu0 0
        %1826 = vmatpush1.bf16.msra.mxu0 0
        %1827 = vmatprep.mubr.bf16.mxu0 0
        %1828 = vmatmul.mubr.bf16.gmra.mrb[0].mxu0 %v1790
        %v1829 = vpop.f32.mrb[0].mxu0
        %v1830 = vadd.f32 0.0, %v1829
        %v1831 = vpop.f32.mrb[0].mxu0
        %v1832 = vpop.f32.mrb[0].mxu0
        %v1833 = vpop.f32.mrb[0].mxu0
        %1834 = vdwg.mxu0
        %v1835 = vpack.c.bf16 %v1830, %v1782
        %1837 = vrot.lane.b32.xlu0 %v1835, 24
        %v1838 = vpop.permute.xlu0 %1837
        %vm1840 = vcmask 261312
        %1841 = vst.msk [vmem:[#allocation4] sm:$0xff] %vm1840, %v1838
        %v1842 = vld [vmem:[#allocation4] sm:$0xff]
        %v1843 = vld [vmem:[%s10] sm:$0xf]
        %v1844 = vld [vmem:[%s10 + $0x4] sm:$0xf]
        %v1845 = vld [vmem:[%s10 + $0x8] sm:$0xf]
        %v1846 = vld [vmem:[%s10 + $0xc] sm:$0xf]
        %v1847 = vld [vmem:[%s11] sm:$0x1]
        %v1849 = vlaneseq
        %v1850 = vshrl.u32 %v1849, 7
        %v1851 = vsub.s32 0, %v1850
        %v1852 = vrot.slane %v1847, %v1851
        %v1858 = vunpack.c.l.b16 %v1843
        %v1859 = vunpack.c.l.b16 %v1844
        %v1860 = vunpack.c.l.b16 %v1845
        %v1861 = vunpack.c.l.b16 %v1846
        %v1862 = vpack.c.b16 %v1859, %v1858
        %v1863 = vpack.c.b16 %v1861, %v1860
        %v1867 = vsel %vm848, %v1842, 0
        %1869 = vmatprep.subr.bf16.mxu0 0
        %1870 = vmatpush1.bf16.msra.mxu0 %v1862
        %1871 = vmatprep.subr.bf16.mxu0 0
        %1872 = vmatpush1.bf16.msra.mxu0 %v1863
        %1873 = vmatprep.subr.bf16.mxu0 0
        %1874 = vmatpush1.bf16.msra.mxu0 0
        %1875 = vmatprep.subr.bf16.mxu0 0
        %1876 = vmatpush1.bf16.msra.mxu0 0
        %1877 = vmatprep.subr.bf16.mxu0 0
        %1878 = vmatpush1.bf16.msra.mxu0 0
        %1879 = vmatprep.subr.bf16.mxu0 0
        %1880 = vmatpush1.bf16.msra.mxu0 0
        %1881 = vmatprep.subr.bf16.mxu0 0
        %1882 = vmatpush1.bf16.msra.mxu0 0
        %1883 = vmatprep.subr.bf16.mxu0 0
        %1884 = vmatpush1.bf16.msra.mxu0 0
        %1885 = vmatprep.subr.bf16.mxu0 0
        %1886 = vmatpush1.bf16.msra.mxu0 0
        %1887 = vmatprep.subr.bf16.mxu0 0
        %1888 = vmatpush1.bf16.msra.mxu0 0
        %1889 = vmatprep.subr.bf16.mxu0 0
        %1890 = vmatpush1.bf16.msra.mxu0 0
        %1891 = vmatprep.subr.bf16.mxu0 0
        %1892 = vmatpush1.bf16.msra.mxu0 0
        %1893 = vmatprep.subr.bf16.mxu0 0
        %1894 = vmatpush1.bf16.msra.mxu0 0
        %1895 = vmatprep.subr.bf16.mxu0 0
        %1896 = vmatpush1.bf16.msra.mxu0 0
        %1897 = vmatprep.subr.bf16.mxu0 0
        %1898 = vmatpush1.bf16.msra.mxu0 0
        %1899 = vmatprep.subr.bf16.mxu0 0
        %1900 = vmatpush1.bf16.msra.mxu0 0
        %1901 = vmatprep.mubr.bf16.mxu0 0
        %1902 = vmatmul.mubr.bf16.gmra.mrb[0].mxu0 %v1867
        %v1903 = vpop.f32.mrb[0].mxu0
        %v1904 = vadd.f32 %v1852, %v1903
        %v1905 = vpop.f32.mrb[0].mxu0
        %v1906 = vpop.f32.mrb[0].mxu0
        %v1907 = vadd.f32 %v1852, %v1906
        %v1908 = vpop.f32.mrb[0].mxu0
        %1909 = vdwg.mxu0
        %v1910 = vmax.f32 %v1904, 0.0
        %v1911 = vmax.f32 %v1907, 0.0
        %1912 = vst.msk [vmem:[%s642] sm:$0xff] %vm848, %v1910
        %1913 = vst.msk [vmem:[%s642 + $0x8] sm:$0xff] %vm848, %v1911
        %s1914 = sand.u32 %s339, 1
        %s1915 = scalar_lea.sflag [#allocation7], %s1914
        %s1916 = sand.u32 %s339, 1
        %s1917 = smul.addr %s1916, 16
        %s1918 = scalar_lea.vmem [#allocation17], %s1917
        %s1919 = sand.u32 %s367, 1
        %s1920 = scalar_lea.sflag [#allocation19], %s1919
        %s1921 = sand.u32 %s367, 1
        %s1922 = smul.addr %s1921, 64
        %s1923 = scalar_lea.vmem [#allocation18], %s1922
        // Predicated region
        $region101: #{tpu_custom_call.1} parent=67 // pred_check
          %p1924 = pneg %p349
        $region102: #{tpu_custom_call.1} parent=67 // pred_check_branch
          %1926 = sbr.rel (%p1924) target = $region104
        $region103: #{tpu_custom_call.1} parent=67 // pred_region
          %s1927 = smul.u32 2, %s45
          %s1929 = ssub.s32 256, 256
          %1930 = vsyncadd %s1915, %s1929
          %s1931 = sadd.s32 %s46, %s1927
          %s1932 = smul.addr %s1931, 128
          %s1933 = scalar_lea.hbm %s12, %s1932
          %s1934 = sshll.u32 %s1918, 4
          %s1935 = int_to_ptr.vmem [resolvable:$true] %s1934
          %1940 = dma.vmem_to_hbm [thread:$0]  %s1935, 256, %s1933, %s1915, 128, 128, 8
        $region104: #{tpu_custom_call.1} parent=67 // pred_fallthru
          _
        // Predicated region
        $region105: #{tpu_custom_call.1} parent=67 // pred_check
          %p1941 = pneg %p377
        $region106: #{tpu_custom_call.1} parent=67 // pred_check_branch
          %1943 = sbr.rel (%p1941) target = $region108
        $region107: #{tpu_custom_call.1} parent=67 // pred_region
          %s1944 = smul.u32 2, %s45
          %s1946 = ssub.s32 1024, 1024
          %1947 = vsyncadd %s1920, %s1946
          %s1948 = smul.addr %s1944, 4
          %s1949 = sadd.s32 %s46, %s1948
          %s1950 = smul.addr %s1949, 128
          %s1951 = scalar_lea.hbm %s13, %s1950
          %s1952 = sshll.u32 %s1923, 4
          %s1953 = int_to_ptr.vmem [resolvable:$true] %s1952
          %1958 = dma.vmem_to_hbm [thread:$0]  %s1953, 1024, %s1951, %s1920, 128, 128, 8
        $region108: #{tpu_custom_call.1} parent=67 // pred_fallthru
          _
      $region68: #{tpu_custom_call.1} parent=5 // pred_fallthru
        _
      %p1959 = scmp.le.s32.totalorder 2, %s36
      // Predicated region
      $region109: #{tpu_custom_call.1} parent=5 // pred_check
        %p1960 = pneg %p1959
      $region110: #{tpu_custom_call.1} parent=5 // pred_check_branch
        %1962 = sbr.rel (%p1960) target = $region112
      $region111: #{tpu_custom_call.1} parent=5 // pred_region
        %s1963 = ssub.s32 %s36, 2
        // Predicated region
        $region113: #{tpu_custom_call.1} parent=111 // pred_check
          %p1964 = pneg %p355
        $region114: #{tpu_custom_call.1} parent=111 // pred_check_branch
          %1966 = sbr.rel (%p1964) target = $region116
        $region115: #{tpu_custom_call.1} parent=111 // pred_region
          %s1967 = sand.u32 %s340, 1
          %s1968 = scalar_lea.sflag [#allocation7], %s1967
          %s1969 = sand.u32 %s340, 1
          %s1970 = smul.addr %s1969, 16
          %s1971 = scalar_lea.vmem [#allocation17], %s1970
          %1972 = dma.done %s1968, 256
        $region116: #{tpu_custom_call.1} parent=111 // pred_fallthru
          _
        // Predicated region
        $region117: #{tpu_custom_call.1} parent=111 // pred_check
          %p1973 = pneg %p383
        $region118: #{tpu_custom_call.1} parent=111 // pred_check_branch
          %1975 = sbr.rel (%p1973) target = $region120
        $region119: #{tpu_custom_call.1} parent=111 // pred_region
          %s1976 = sand.u32 %s368, 1
          %s1977 = scalar_lea.sflag [#allocation19], %s1976
          %s1978 = sand.u32 %s368, 1
          %s1979 = smul.addr %s1978, 64
          %s1980 = scalar_lea.vmem [#allocation18], %s1979
          %1981 = dma.done %s1977, 1024
        $region120: #{tpu_custom_call.1} parent=111 // pred_fallthru
          _
      $region112: #{tpu_custom_call.1} parent=5 // pred_fallthru
        _
    $region6: #{tpu_custom_call.1} parent=1 // loop_footer
      %s40 = sadd.s32 1, %s36
    $region7: #{tpu_custom_call.1} parent=1 // loop_footer_branch
      %35 = sbr.rel target = $region3
    $region8: #{tpu_custom_call.1} parent=1 // loop_exit
      _
    %1982 = vsyncpa [#allocation6], 1
    %s1983 = scalar_lea.sflag [#allocation6], 1
    %1984 = vsyncpa %s1983, 1
    %1985 = vsyncpa [#allocation9], 1
    %s1986 = scalar_lea.sflag [#allocation9], 1
    %1987 = vsyncpa %s1986, 1
    %1988 = vsyncpa [#allocation12], 1
    %s1989 = scalar_lea.sflag [#allocation12], 1
    %1990 = vsyncpa %s1989, 1
    %1991 = vsyncpa [#allocation15], 1
    %1992 = vsyncpa [#allocation7], 1
    %s1993 = scalar_lea.sflag [#allocation7], 1
    %1994 = vsyncpa %s1993, 1
    %1995 = vsyncpa [#allocation19], 1
    %s1996 = scalar_lea.sflag [#allocation19], 1
    %1997 = vsyncpa %s1996, 1

</llo_original>
